<compile_context>
chip_gen: v6e
topology: v6e:2x2x1
jax: 0.10.0
libtpu: 0.0.40
codegen_flags: <defaults>
</compile_context>

<pallas_src>
import functools
import numpy as np
import jax
import jax.numpy as jnp
from jax import lax
from jax.experimental import pallas as pl
from jax.experimental.pallas import tpu as pltpu

# ---------------- synthetic config (small) ----------------
IN_CHANNELS = 64      # roi / union feature dim (4096 in the real model)
POOLING_DIM = 128     # CONTEXT_POOLING_DIM
NUM_OBJ_CLS = 16      # ROI_BOX_HEAD.NUM_CLASSES (incl. background 0)
NUM_REL_CLS = 8       # ROI_RELATION_HEAD.NUM_CLASSES (incl. background 0)
NMS_THRESH = 0.5
TM = 128              # relation row tile
LANE = 128            # classifier outputs padded to lane width


def _round_up(x, m):
    return ((x + m - 1) // m) * m


# ---------------- fused Pallas kernel ----------------
def _gpsnet_fused_kernel(si_ref, oi_ref, u_ref, x_ref,
                         w1_ref, b1_ref, w2_ref, b2_ref,
                         ws_ref, wo_ref, wu_ref, bu_ref, bp_ref,
                         wr_ref, br_ref,
                         obj_logit_ref, rel_logit_ref,
                         projs_ref, projo_ref,
                         *, num_valid_obj):
    no_pad = projs_ref.shape[0]

    # ---- grid step 0: object path over the whole (small) object set ----
    #   obj_feats = relu(roi @ W_proj + b); refined_obj_logits = obj_feats @ W_cls + b
    # Re-associated pair fusion: (onehot @ obj_feats) @ W_s == onehot @ (obj_feats @ W_s),
    # so the two PxP projections run once per object here, not once per relation,
    # and obj_feats itself never leaves VMEM.
    @pl.when(pl.program_id(0) == 0)
    def _():
        row = lax.broadcasted_iota(jnp.int32, (no_pad, 1), 0)
        # Zero OOB rows of the partially-read roi block so garbage (NaN/Inf)
        # can never contaminate the one-hot gather contraction below.
        x = jnp.where(row < num_valid_obj, x_ref[...], 0.0)
        h = jnp.dot(x.astype(jnp.bfloat16), w1_ref[...],
                    preferred_element_type=jnp.float32)
        h = jnp.maximum(h + b1_ref[...], 0.0)                     # f32 bias+ReLU (VPU)
        h16 = h.astype(jnp.bfloat16)
        obj_logit_ref[...] = (jnp.dot(h16, w2_ref[...],
                                      preferred_element_type=jnp.float32)
                              + b2_ref[...])
        projs_ref[...] = jnp.dot(h16, ws_ref[...],
                                 preferred_element_type=jnp.float32
                                 ).astype(projs_ref.dtype)
        projo_ref[...] = jnp.dot(h16, wo_ref[...],
                                 preferred_element_type=jnp.float32
                                 ).astype(projo_ref.dtype)

    # ---- relation path for this row tile ----
    tm = si_ref.shape[0]
    fused = (jnp.dot(u_ref[...].astype(jnp.bfloat16), wu_ref[...],
                     preferred_element_type=jnp.float32) + bu_ref[...])
    iota = lax.broadcasted_iota(jnp.int32, (tm, no_pad), 1)
    # Build each one-hot and consume it immediately (limits live vreg pressure).
    oh_s = jnp.where(si_ref[...] == iota, 1.0, 0.0).astype(jnp.bfloat16)
    fused = fused + jnp.dot(oh_s, projs_ref[...], preferred_element_type=jnp.float32)
    oh_o = jnp.where(oi_ref[...] == iota, 1.0, 0.0).astype(jnp.bfloat16)
    fused = fused + jnp.dot(oh_o, projo_ref[...], preferred_element_type=jnp.float32)
    rel_feats = jnp.maximum(fused + bp_ref[...], 0.0)             # f32 bias+ReLU (VPU)
    rel_logit_ref[...] = (jnp.dot(rel_feats.astype(jnp.bfloat16), wr_ref[...],
                                  preferred_element_type=jnp.float32)
                          + br_ref[...])


# ---------------- kernel wrapper ----------------
def gpsnet_dense_path(roi_features, union_features, sub_idx, obj_idx, params):
    """One fused pallas_call for the whole dense path.

    Returns (refined_obj_logits (No, NUM_OBJ_CLS), rel_cls_logits (Nr, NUM_REL_CLS));
    the FrequencyBias rows are added outside with a plain jnp gather+add.
    """
    No, K = roi_features.shape
    Nr = union_features.shape[0]
    P = POOLING_DIM

    NO_PAD = _round_up(No, 8)                # resident obj rows / scratch rows
    CO_PAD = _round_up(NUM_OBJ_CLS, LANE)    # lane-dense classifier outputs
    CR_PAD = _round_up(NUM_REL_CLS, LANE)
    grid = (pl.cdiv(Nr, TM),)
    NR_PAD = grid[0] * TM                    # output rows padded -> unmasked stores

    # Streamed activations stay f32 in HBM (no extra host-side pad/copy pass);
    # they are cast to bf16 inside the kernel right before the MXU.
    x = roi_features.astype(jnp.float32)
    u = union_features.astype(jnp.float32)
    si = sub_idx.astype(jnp.int32).reshape(Nr, 1)
    oi = obj_idx.astype(jnp.int32).reshape(Nr, 1)

    f32, bf16 = jnp.float32, jnp.bfloat16
    w1 = params["w_obj_proj"].astype(bf16)
    b1 = params["b_obj_proj"].reshape(1, P).astype(f32)
    w2 = jnp.pad(params["w_obj_cls"], ((0, 0), (0, CO_PAD - NUM_OBJ_CLS))).astype(bf16)
    b2 = jnp.pad(params["b_obj_cls"], (0, CO_PAD - NUM_OBJ_CLS)).reshape(1, CO_PAD).astype(f32)
    # nn.Linear(2P, P) split: [f_s ; f_o] @ W == f_s @ W[:P] + f_o @ W[P:]
    ws = params["w_pair"][:P].astype(bf16)
    wo = params["w_pair"][P:].astype(bf16)
    bp = params["b_pair"].reshape(1, P).astype(f32)
    wu = params["w_union_proj"].astype(bf16)
    bu = params["b_union_proj"].reshape(1, P).astype(f32)
    wr = jnp.pad(params["w_rel_cls"], ((0, 0), (0, CR_PAD - NUM_REL_CLS))).astype(bf16)
    br = jnp.pad(params["b_rel_cls"], (0, CR_PAD - NUM_REL_CLS)).reshape(1, CR_PAD).astype(f32)

    kernel = functools.partial(_gpsnet_fused_kernel, num_valid_obj=No)

    obj_logits, rel_logits = pl.pallas_call(
        kernel,
        out_shape=(jax.ShapeDtypeStruct((NO_PAD, CO_PAD), jnp.float32),
                   jax.ShapeDtypeStruct((NR_PAD, CR_PAD), jnp.float32)),
        grid=grid,
        in_specs=[
            pl.BlockSpec((TM, 1), lambda i: (i, 0)),        # sub idx (streamed)
            pl.BlockSpec((TM, 1), lambda i: (i, 0)),        # obj idx (streamed)
            pl.BlockSpec((TM, K), lambda i: (i, 0)),        # union feats (streamed)
            pl.BlockSpec((NO_PAD, K), lambda i: (0, 0)),    # roi feats (resident)
            pl.BlockSpec((K, P), lambda i: (0, 0)),         # w_obj_proj
            pl.BlockSpec((1, P), lambda i: (0, 0)),         # b_obj_proj
            pl.BlockSpec((P, CO_PAD), lambda i: (0, 0)),    # w_obj_cls
            pl.BlockSpec((1, CO_PAD), lambda i: (0, 0)),    # b_obj_cls
            pl.BlockSpec((P, P), lambda i: (0, 0)),         # w_pair[:P]
            pl.BlockSpec((P, P), lambda i: (0, 0)),         # w_pair[P:]
            pl.BlockSpec((K, P), lambda i: (0, 0)),         # w_union_proj
            pl.BlockSpec((1, P), lambda i: (0, 0)),         # b_union_proj
            pl.BlockSpec((1, P), lambda i: (0, 0)),         # b_pair
            pl.BlockSpec((P, CR_PAD), lambda i: (0, 0)),    # w_rel_cls
            pl.BlockSpec((1, CR_PAD), lambda i: (0, 0)),    # b_rel_cls
        ],
        out_specs=(pl.BlockSpec((NO_PAD, CO_PAD), lambda i: (0, 0)),
                   pl.BlockSpec((TM, CR_PAD), lambda i: (i, 0))),
        scratch_shapes=[pltpu.VMEM((NO_PAD, P), jnp.bfloat16),   # obj_feats @ W_s
                        pltpu.VMEM((NO_PAD, P), jnp.bfloat16)],  # obj_feats @ W_o
        # Grid step 0 fills the scratch every later tile reads -> sequential axis.
        compiler_params=pltpu.CompilerParams(dimension_semantics=("arbitrary",)),
    )(si, oi, u, x, w1, b1, w2, b2, ws, wo, wu, bu, bp, wr, br)

    return obj_logits[:No, :NUM_OBJ_CLS], rel_logits[:Nr, :NUM_REL_CLS]


# ---------------- plain-JAX glue (sequential / gather pieces) ----------------
def nms_overlaps(boxes):
    """boxes: (N, C, 4) -> per-class pairwise IoU (N, N, C)."""
    x1 = jnp.maximum(boxes[:, None, :, 0], boxes[None, :, :, 0])
    y1 = jnp.maximum(boxes[:, None, :, 1], boxes[None, :, :, 1])
    x2 = jnp.minimum(boxes[:, None, :, 2], boxes[None, :, :, 2])
    y2 = jnp.minimum(boxes[:, None, :, 3], boxes[None, :, :, 3])
    w = jnp.clip(x2 - x1 + 1.0, 0.0)
    h = jnp.clip(y2 - y1 + 1.0, 0.0)
    inter = w * h
    area = (boxes[..., 2] - boxes[..., 0] + 1.0) * (boxes[..., 3] - boxes[..., 1] + 1.0)
    union = area[:, None, :] + area[None, :, :] - inter
    return inter / union


def obj_prediction_nms(boxes_per_cls, pred_logits, nms_thresh=0.5):
    """Greedy per-class label assignment with overlap suppression.
    Matches the reference, which runs this on the *concatenated* proposals of
    all images.  Inherently sequential -> stays in plain JAX (lax.fori_loop)."""
    num_obj, num_cls = pred_logits.shape
    is_overlap = nms_overlaps(boxes_per_cls) >= nms_thresh  # (N, N, C)
    prob = jax.nn.softmax(pred_logits, axis=1)
    prob = prob.at[:, 0].set(0.0)
    cols = jnp.arange(num_cls)

    def body(_, carry):
        prob, labels = carry
        flat = jnp.argmax(prob)
        box_ind = flat // num_cls
        cls_ind = flat % num_cls
        labels = labels.at[box_ind].set(cls_ind.astype(jnp.int32))
        sup = is_overlap[box_ind, :, cls_ind]  # (N,)
        prob = jnp.where(sup[:, None] & (cols[None, :] == cls_ind), 0.0, prob)
        prob = prob.at[box_ind].set(-1.0)
        return prob, labels

    _, labels = lax.fori_loop(0, num_obj, body,
                              (prob, jnp.zeros((num_obj,), jnp.int32)))
    return labels


# ---------------- GPSNetPredictor forward ----------------
def gpsnet_predictor_forward(params, rel_pair_idxs, roi_features,
                             union_features, boxes_per_cls_list, num_objs):
    # TODO(synk): GPSNetContext's iterative gated message passing (num_iter=2) is
    # not reproduced here (source not provided); the context is a Pallas
    # linear-projection + pairwise-fusion stand-in producing the same shapes.
    num_rels = [int(p.shape[0]) for p in rel_pair_idxs]

    # global (concatenated) pair indices
    offsets = np.cumsum([0] + num_objs[:-1]).tolist()
    sub_idx = jnp.concatenate([p[:, 0] + off for p, off in zip(rel_pair_idxs, offsets)])
    obj_idx = jnp.concatenate([p[:, 1] + off for p, off in zip(rel_pair_idxs, offsets)])

    # --- single fused Pallas kernel: obj path + pair gather/fusion + rel path ---
    refined_obj_logits, rel_cls_logits = gpsnet_dense_path(
        roi_features, union_features, sub_idx, obj_idx, params)

    # mode == 'sgcls', backbone not frozen, update manner 'replace'
    obj_pred_logits = refined_obj_logits
    boxes_per_cls = jnp.concatenate(boxes_per_cls_list, axis=0)          # (No, C_obj, 4)
    obj_pred_labels = obj_prediction_nms(boxes_per_cls, obj_pred_logits, NMS_THRESH)

    # use_bias: FrequencyBias.index_with_labels(pair_pred) -> row gather + add.
    pair_pred = jnp.stack([obj_pred_labels[sub_idx], obj_pred_labels[obj_idx]], axis=1)
    freq_rows = params["freq_bias"][pair_pred[:, 0] * NUM_OBJ_CLS + pair_pred[:, 1]]
    rel_cls_logits = rel_cls_logits + freq_rows

    # split per image
    obj_splits, rel_splits = [], []
    o0 = 0
    for n in num_objs:
        obj_splits.append(obj_pred_logits[o0:o0 + n]); o0 += n
    r0 = 0
    for n in num_rels:
        rel_splits.append(rel_cls_logits[r0:r0 + n]); r0 += n

    add_losses = {}
    return obj_splits, rel_splits, add_losses


# ---------------- deterministic parameters ----------------
def init_params(key):
    ks = jax.random.split(key, 12)
    s = 0.05

    def w(k, shape):
        return jax.random.normal(k, shape, jnp.float32) * s

    return {
        # simplified GPSNetContext
        "w_obj_proj": w(ks[0], (IN_CHANNELS, POOLING_DIM)),
        "b_obj_proj": w(ks[1], (POOLING_DIM,)),
        "w_union_proj": w(ks[2], (IN_CHANNELS, POOLING_DIM)),
        "b_union_proj": w(ks[3], (POOLING_DIM,)),
        "w_pair": w(ks[4], (2 * POOLING_DIM, POOLING_DIM)),
        "b_pair": w(ks[5], (POOLING_DIM,)),
        # classifiers (build_classifier(pooling_dim, num_cls) ~ nn.Linear)
        "w_obj_cls": w(ks[6], (POOLING_DIM, NUM_OBJ_CLS)),
        "b_obj_cls": w(ks[7], (NUM_OBJ_CLS,)),
        "w_rel_cls": w(ks[8], (POOLING_DIM, NUM_REL_CLS)),
        "b_rel_cls": w(ks[9], (NUM_REL_CLS,)),
        # FrequencyBias embedding table (num_obj_cls^2, num_rel_cls)
        "freq_bias": w(ks[10], (NUM_OBJ_CLS * NUM_OBJ_CLS, NUM_REL_CLS)),
    }


# ---------------- example run ----------------
if __name__ == "__main__":
    key = jax.random.PRNGKey(0)
    kp, k1, k2, k3, k4 = jax.random.split(key, 5)
    params = init_params(kp)

    num_objs = [5, 6]            # objects per image
    # relation pairs per image (subject, object) local indices
    rel_pair_idxs = [
        jnp.array([[0, 1], [1, 0], [2, 3], [3, 4], [4, 2], [0, 4]], jnp.int32),
        jnp.array([[0, 1], [1, 2], [2, 3], [3, 4], [4, 5], [5, 0], [1, 4], [2, 5]],
                  jnp.int32),
    ]
    total_obj = sum(num_objs)
    total_rel = sum(int(p.shape[0]) for p in rel_pair_idxs)

    roi_features = jax.random.normal(k1, (total_obj, IN_CHANNELS), jnp.float32)
    union_features = jax.random.normal(k2, (total_rel, IN_CHANNELS), jnp.float32)

    # boxes_per_cls: per-image (num_obj, NUM_OBJ_CLS, 4), valid xyxy boxes
    def make_boxes(k, n):
        ka, kb = jax.random.split(k)
        xy = jax.random.uniform(ka, (n, NUM_OBJ_CLS, 2), minval=0.0, maxval=50.0)
        wh = jax.random.uniform(kb, (n, NUM_OBJ_CLS, 2), minval=5.0, maxval=30.0)
        return jnp.concatenate([xy, xy + wh], axis=-1)

    boxes_per_cls_list = [make_boxes(k3, num_objs[0]), make_boxes(k4, num_objs[1])]

    obj_logits, rel_logits, add_losses = gpsnet_predictor_forward(
        params, rel_pair_idxs, roi_features, union_features,
        boxes_per_cls_list, num_objs)

    for t in obj_logits + rel_logits:
        jax.block_until_ready(t)

    assert [t.shape for t in obj_logits] == [(5, NUM_OBJ_CLS), (6, NUM_OBJ_CLS)]
    assert [t.shape for t in rel_logits] == [(6, NUM_REL_CLS), (8, NUM_REL_CLS)]
    assert all(bool(jnp.all(jnp.isfinite(t))) for t in obj_logits + rel_logits)
    assert isinstance(add_losses, dict)
    print("KERNEL_OK")
</pallas_src>

<mosaic_0001>
module attributes {stable_mosaic.version = 11 : i64} {
  func.func @_gpsnet_fused_kernel(%arg0: i32, %arg1: memref<128x1xi32, #tpu.memory_space<vmem>>, %arg2: memref<128x1xi32, #tpu.memory_space<vmem>>, %arg3: memref<128x64xf32, #tpu.memory_space<vmem>>, %arg4: memref<16x64xf32, #tpu.memory_space<vmem>>, %arg5: memref<64x128xbf16, #tpu.memory_space<vmem>>, %arg6: memref<1x128xf32, #tpu.memory_space<vmem>>, %arg7: memref<128x128xbf16, #tpu.memory_space<vmem>>, %arg8: memref<1x128xf32, #tpu.memory_space<vmem>>, %arg9: memref<128x128xbf16, #tpu.memory_space<vmem>>, %arg10: memref<128x128xbf16, #tpu.memory_space<vmem>>, %arg11: memref<64x128xbf16, #tpu.memory_space<vmem>>, %arg12: memref<1x128xf32, #tpu.memory_space<vmem>>, %arg13: memref<1x128xf32, #tpu.memory_space<vmem>>, %arg14: memref<128x128xbf16, #tpu.memory_space<vmem>>, %arg15: memref<1x128xf32, #tpu.memory_space<vmem>>, %arg16: memref<16x128xf32, #tpu.memory_space<vmem>>, %arg17: memref<128x128xf32, #tpu.memory_space<vmem>>, %arg18: memref<16x128xbf16, #tpu.memory_space<vmem>>, %arg19: memref<16x128xbf16, #tpu.memory_space<vmem>>) attributes {dimension_semantics = [#tpu.dimension_semantics<arbitrary>], iteration_bounds = array<i64: 1>, scalar_prefetch = 0 : i64, scratch_operands = 2 : i64, tpu.core_type = #tpu.core_type<tc>, window_params = [{transform_indices = @transform_0, window_bounds = array<i64: 128, 1>}, {transform_indices = @transform_1, window_bounds = array<i64: 128, 1>}, {transform_indices = @transform_2, window_bounds = array<i64: 128, 64>}, {transform_indices = @transform_3, window_bounds = array<i64: 16, 64>}, {pipeline_mode = #tpu.pipeline_mode<synchronous>, transform_indices = @transform_4, window_bounds = array<i64: 64, 128>}, {pipeline_mode = #tpu.pipeline_mode<synchronous>, transform_indices = @transform_5, window_bounds = array<i64: 1, 128>}, {pipeline_mode = #tpu.pipeline_mode<synchronous>, transform_indices = @transform_6, window_bounds = array<i64: 128, 128>}, {pipeline_mode = #tpu.pipeline_mode<synchronous>, transform_indices = @transform_7, window_bounds = array<i64: 1, 128>}, {pipeline_mode = #tpu.pipeline_mode<synchronous>, transform_indices = @transform_8, window_bounds = array<i64: 128, 128>}, {pipeline_mode = #tpu.pipeline_mode<synchronous>, transform_indices = @transform_9, window_bounds = array<i64: 128, 128>}, {pipeline_mode = #tpu.pipeline_mode<synchronous>, transform_indices = @transform_10, window_bounds = array<i64: 64, 128>}, {pipeline_mode = #tpu.pipeline_mode<synchronous>, transform_indices = @transform_11, window_bounds = array<i64: 1, 128>}, {pipeline_mode = #tpu.pipeline_mode<synchronous>, transform_indices = @transform_12, window_bounds = array<i64: 1, 128>}, {pipeline_mode = #tpu.pipeline_mode<synchronous>, transform_indices = @transform_13, window_bounds = array<i64: 128, 128>}, {pipeline_mode = #tpu.pipeline_mode<synchronous>, transform_indices = @transform_14, window_bounds = array<i64: 1, 128>}, {pipeline_mode = #tpu.pipeline_mode<synchronous>, transform_indices = @transform_15, window_bounds = array<i64: 16, 128>}, {transform_indices = @transform_16, window_bounds = array<i64: 128, 128>}]} {
    %c0_i32 = arith.constant 0 : i32
    %0 = arith.cmpi eq, %arg0, %c0_i32 : i32
    %1 = arith.extui %0 : i1 to i32
    %c0_i32_0 = arith.constant 0 : i32
    %2 = arith.cmpi ne, %1, %c0_i32_0 : i32
    scf.if %2 {
      %43 = tpu.iota {dimensions = array<i32: 0>} : vector<16x1xi32>
      %c11_i32 = arith.constant 11 : i32
      %44 = vector.broadcast %c11_i32 : i32 to vector<16x1xi32>
      %45 = arith.cmpi slt, %43, %44 : vector<16x1xi32>
      %c0_30 = arith.constant 0 : index
      %c0_31 = arith.constant 0 : index
      %46 = vector.load %arg4[%c0_30, %c0_31] : memref<16x64xf32, #tpu.memory_space<vmem>>, vector<16x64xf32>
      %cst_32 = arith.constant 0.000000e+00 : f32
      %47 = vector.shape_cast %45 : vector<16x1xi1> to vector<16x1xi1>
      %48 = vector.broadcast %47 : vector<16x1xi1> to vector<16x64xi1>
      %49 = vector.broadcast %cst_32 : f32 to vector<16x64xf32>
      %50 = arith.select %48, %46, %49 : vector<16x64xi1>, vector<16x64xf32>
      %51 = arith.truncf %50 : vector<16x64xf32> to vector<16x64xbf16>
      %c0_33 = arith.constant 0 : index
      %c0_34 = arith.constant 0 : index
      %52 = vector.load %arg5[%c0_33, %c0_34] : memref<64x128xbf16, #tpu.memory_space<vmem>>, vector<64x128xbf16>
      %cst_35 = arith.constant dense<0.000000e+00> : vector<16x128xf32>
      %53 = tpu.matmul %51, %52, %cst_35 {dimension_numbers = #tpu.dot_dimension_numbers<[1], [0], [0], [1], [0, 0, 1, 1], [], []>} : vector<16x64xbf16>, vector<64x128xbf16>, vector<16x128xf32> -> vector<16x128xf32>
      %c0_36 = arith.constant 0 : index
      %c0_37 = arith.constant 0 : index
      %54 = vector.load %arg6[%c0_36, %c0_37] : memref<1x128xf32, #tpu.memory_space<vmem>>, vector<1x128xf32>
      %55 = vector.broadcast %54 : vector<1x128xf32> to vector<16x128xf32>
      %56 = arith.addf %53, %55 : vector<16x128xf32>
      %cst_38 = arith.constant 0.000000e+00 : f32
      %57 = vector.broadcast %cst_38 : f32 to vector<16x128xf32>
      %58 = arith.maximumf %56, %57 : vector<16x128xf32>
      %59 = arith.truncf %58 : vector<16x128xf32> to vector<16x128xbf16>
      %c0_39 = arith.constant 0 : index
      %c0_40 = arith.constant 0 : index
      %60 = vector.load %arg7[%c0_39, %c0_40] : memref<128x128xbf16, #tpu.memory_space<vmem>>, vector<128x128xbf16>
      %cst_41 = arith.constant dense<0.000000e+00> : vector<16x128xf32>
      %61 = tpu.matmul %59, %60, %cst_41 {dimension_numbers = #tpu.dot_dimension_numbers<[1], [0], [0], [1], [0, 0, 1, 1], [], []>} : vector<16x128xbf16>, vector<128x128xbf16>, vector<16x128xf32> -> vector<16x128xf32>
      %c0_42 = arith.constant 0 : index
      %c0_43 = arith.constant 0 : index
      %62 = vector.load %arg8[%c0_42, %c0_43] : memref<1x128xf32, #tpu.memory_space<vmem>>, vector<1x128xf32>
      %63 = vector.broadcast %62 : vector<1x128xf32> to vector<16x128xf32>
      %64 = arith.addf %61, %63 : vector<16x128xf32>
      %c0_44 = arith.constant 0 : index
      %c0_45 = arith.constant 0 : index
      %65 = vector.load %arg16[%c0_44, %c0_45] : memref<16x128xf32, #tpu.memory_space<vmem>>, vector<16x128xf32>
      tpu.vector_store %arg16[%c0_44, %c0_45], %64 {strides = array<i32>} : memref<16x128xf32, #tpu.memory_space<vmem>>, vector<16x128xf32>,
      %c0_46 = arith.constant 0 : index
      %c0_47 = arith.constant 0 : index
      %66 = vector.load %arg9[%c0_46, %c0_47] : memref<128x128xbf16, #tpu.memory_space<vmem>>, vector<128x128xbf16>
      %cst_48 = arith.constant dense<0.000000e+00> : vector<16x128xf32>
      %67 = tpu.matmul %59, %66, %cst_48 {dimension_numbers = #tpu.dot_dimension_numbers<[1], [0], [0], [1], [0, 0, 1, 1], [], []>} : vector<16x128xbf16>, vector<128x128xbf16>, vector<16x128xf32> -> vector<16x128xf32>
      %68 = arith.truncf %67 : vector<16x128xf32> to vector<16x128xbf16>
      %c0_49 = arith.constant 0 : index
      %c0_50 = arith.constant 0 : index
      %69 = vector.load %arg18[%c0_49, %c0_50] : memref<16x128xbf16, #tpu.memory_space<vmem>>, vector<16x128xbf16>
      tpu.vector_store %arg18[%c0_49, %c0_50], %68 {strides = array<i32>} : memref<16x128xbf16, #tpu.memory_space<vmem>>, vector<16x128xbf16>,
      %c0_51 = arith.constant 0 : index
      %c0_52 = arith.constant 0 : index
      %70 = vector.load %arg10[%c0_51, %c0_52] : memref<128x128xbf16, #tpu.memory_space<vmem>>, vector<128x128xbf16>
      %cst_53 = arith.constant dense<0.000000e+00> : vector<16x128xf32>
      %71 = tpu.matmul %59, %70, %cst_53 {dimension_numbers = #tpu.dot_dimension_numbers<[1], [0], [0], [1], [0, 0, 1, 1], [], []>} : vector<16x128xbf16>, vector<128x128xbf16>, vector<16x128xf32> -> vector<16x128xf32>
      %72 = arith.truncf %71 : vector<16x128xf32> to vector<16x128xbf16>
      %c0_54 = arith.constant 0 : index
      %c0_55 = arith.constant 0 : index
      %73 = vector.load %arg19[%c0_54, %c0_55] : memref<16x128xbf16, #tpu.memory_space<vmem>>, vector<16x128xbf16>
      tpu.vector_store %arg19[%c0_54, %c0_55], %72 {strides = array<i32>} : memref<16x128xbf16, #tpu.memory_space<vmem>>, vector<16x128xbf16>,
    } else {
    }
    %c0 = arith.constant 0 : index
    %c0_1 = arith.constant 0 : index
    %3 = vector.load %arg3[%c0, %c0_1] : memref<128x64xf32, #tpu.memory_space<vmem>>, vector<128x64xf32>
    %4 = arith.truncf %3 : vector<128x64xf32> to vector<128x64xbf16>
    %c0_2 = arith.constant 0 : index
    %c0_3 = arith.constant 0 : index
    %5 = vector.load %arg11[%c0_2, %c0_3] : memref<64x128xbf16, #tpu.memory_space<vmem>>, vector<64x128xbf16>
    %cst = arith.constant dense<0.000000e+00> : vector<128x128xf32>
    %6 = tpu.matmul %4, %5, %cst {dimension_numbers = #tpu.dot_dimension_numbers<[1], [0], [0], [1], [0, 0, 1, 1], [], []>} : vector<128x64xbf16>, vector<64x128xbf16>, vector<128x128xf32> -> vector<128x128xf32>
    %c0_4 = arith.constant 0 : index
    %c0_5 = arith.constant 0 : index
    %7 = vector.load %arg12[%c0_4, %c0_5] : memref<1x128xf32, #tpu.memory_space<vmem>>, vector<1x128xf32>
    %8 = vector.broadcast %7 : vector<1x128xf32> to vector<128x128xf32>
    %9 = arith.addf %6, %8 : vector<128x128xf32>
    %10 = tpu.iota {dimensions = array<i32: 1>} : vector<128x16xi32>
    %c0_6 = arith.constant 0 : index
    %c0_7 = arith.constant 0 : index
    %11 = vector.load %arg1[%c0_6, %c0_7] : memref<128x1xi32, #tpu.memory_space<vmem>>, vector<128x1xi32>
    %12 = vector.broadcast %11 : vector<128x1xi32> to vector<128x16xi32>
    %13 = arith.cmpi eq, %12, %10 : vector<128x16xi32>
    %cst_8 = arith.constant 1.000000e+00 : f32
    %cst_9 = arith.constant 0.000000e+00 : f32
    %14 = vector.broadcast %cst_8 : f32 to vector<128x16xf32>
    %15 = vector.broadcast %cst_9 : f32 to vector<128x16xf32>
    %16 = arith.select %13, %14, %15 : vector<128x16xi1>, vector<128x16xf32>
    %17 = arith.truncf %16 : vector<128x16xf32> to vector<128x16xbf16>
    %c0_10 = arith.constant 0 : index
    %c0_11 = arith.constant 0 : index
    %18 = vector.load %arg18[%c0_10, %c0_11] : memref<16x128xbf16, #tpu.memory_space<vmem>>, vector<16x128xbf16>
    %cst_12 = arith.constant dense<0.000000e+00> : vector<128x128xf32>
    %19 = tpu.matmul %17, %18, %cst_12 {dimension_numbers = #tpu.dot_dimension_numbers<[1], [0], [0], [1], [0, 0, 1, 1], [], []>} : vector<128x16xbf16>, vector<16x128xbf16>, vector<128x128xf32> -> vector<128x128xf32>
    %20 = arith.addf %9, %19 : vector<128x128xf32>
    %c0_13 = arith.constant 0 : index
    %c0_14 = arith.constant 0 : index
    %21 = vector.load %arg2[%c0_13, %c0_14] : memref<128x1xi32, #tpu.memory_space<vmem>>, vector<128x1xi32>
    %22 = vector.broadcast %21 : vector<128x1xi32> to vector<128x16xi32>
    %23 = arith.cmpi eq, %22, %10 : vector<128x16xi32>
    %cst_15 = arith.constant 1.000000e+00 : f32
    %cst_16 = arith.constant 0.000000e+00 : f32
    %24 = vector.broadcast %cst_15 : f32 to vector<128x16xf32>
    %25 = vector.broadcast %cst_16 : f32 to vector<128x16xf32>
    %26 = arith.select %23, %24, %25 : vector<128x16xi1>, vector<128x16xf32>
    %27 = arith.truncf %26 : vector<128x16xf32> to vector<128x16xbf16>
    %c0_17 = arith.constant 0 : index
    %c0_18 = arith.constant 0 : index
    %28 = vector.load %arg19[%c0_17, %c0_18] : memref<16x128xbf16, #tpu.memory_space<vmem>>, vector<16x128xbf16>
    %cst_19 = arith.constant dense<0.000000e+00> : vector<128x128xf32>
    %29 = tpu.matmul %27, %28, %cst_19 {dimension_numbers = #tpu.dot_dimension_numbers<[1], [0], [0], [1], [0, 0, 1, 1], [], []>} : vector<128x16xbf16>, vector<16x128xbf16>, vector<128x128xf32> -> vector<128x128xf32>
    %30 = arith.addf %20, %29 : vector<128x128xf32>
    %c0_20 = arith.constant 0 : index
    %c0_21 = arith.constant 0 : index
    %31 = vector.load %arg13[%c0_20, %c0_21] : memref<1x128xf32, #tpu.memory_space<vmem>>, vector<1x128xf32>
    %32 = vector.broadcast %31 : vector<1x128xf32> to vector<128x128xf32>
    %33 = arith.addf %30, %32 : vector<128x128xf32>
    %cst_22 = arith.constant 0.000000e+00 : f32
    %34 = vector.broadcast %cst_22 : f32 to vector<128x128xf32>
    %35 = arith.maximumf %33, %34 : vector<128x128xf32>
    %36 = arith.truncf %35 : vector<128x128xf32> to vector<128x128xbf16>
    %c0_23 = arith.constant 0 : index
    %c0_24 = arith.constant 0 : index
    %37 = vector.load %arg14[%c0_23, %c0_24] : memref<128x128xbf16, #tpu.memory_space<vmem>>, vector<128x128xbf16>
    %cst_25 = arith.constant dense<0.000000e+00> : vector<128x128xf32>
    %38 = tpu.matmul %36, %37, %cst_25 {dimension_numbers = #tpu.dot_dimension_numbers<[1], [0], [0], [1], [0, 0, 1, 1], [], []>} : vector<128x128xbf16>, vector<128x128xbf16>, vector<128x128xf32> -> vector<128x128xf32>
    %c0_26 = arith.constant 0 : index
    %c0_27 = arith.constant 0 : index
    %39 = vector.load %arg15[%c0_26, %c0_27] : memref<1x128xf32, #tpu.memory_space<vmem>>, vector<1x128xf32>
    %40 = vector.broadcast %39 : vector<1x128xf32> to vector<128x128xf32>
    %41 = arith.addf %38, %40 : vector<128x128xf32>
    %c0_28 = arith.constant 0 : index
    %c0_29 = arith.constant 0 : index
    %42 = vector.load %arg17[%c0_28, %c0_29] : memref<128x128xf32, #tpu.memory_space<vmem>>, vector<128x128xf32>
    tpu.vector_store %arg17[%c0_28, %c0_29], %41 {strides = array<i32>} : memref<128x128xf32, #tpu.memory_space<vmem>>, vector<128x128xf32>,
    return
  }
  func.func @transform_0(%arg0: i32) -> (i32, i32) {
    %c0_i32 = arith.constant 0 : i32
    %c0_i32_0 = arith.constant 0 : i32
    return %arg0, %c0_i32 : i32, i32
  }
  func.func @transform_1(%arg0: i32) -> (i32, i32) {
    %c0_i32 = arith.constant 0 : i32
    %c0_i32_0 = arith.constant 0 : i32
    return %arg0, %c0_i32 : i32, i32
  }
  func.func @transform_2(%arg0: i32) -> (i32, i32) {
    %c0_i32 = arith.constant 0 : i32
    %c0_i32_0 = arith.constant 0 : i32
    return %arg0, %c0_i32 : i32, i32
  }
  func.func @transform_3(%arg0: i32) -> (i32, i32) {
    %c0_i32 = arith.constant 0 : i32
    %c0_i32_0 = arith.constant 0 : i32
    %c0_i32_1 = arith.constant 0 : i32
    return %c0_i32, %c0_i32_0 : i32, i32
  }
  func.func @transform_4(%arg0: i32) -> (i32, i32) {
    %c0_i32 = arith.constant 0 : i32
    %c0_i32_0 = arith.constant 0 : i32
    %c0_i32_1 = arith.constant 0 : i32
    return %c0_i32, %c0_i32_0 : i32, i32
  }
  func.func @transform_5(%arg0: i32) -> (i32, i32) {
    %c0_i32 = arith.constant 0 : i32
    %c0_i32_0 = arith.constant 0 : i32
    %c0_i32_1 = arith.constant 0 : i32
    return %c0_i32, %c0_i32_0 : i32, i32
  }
  func.func @transform_6(%arg0: i32) -> (i32, i32) {
    %c0_i32 = arith.constant 0 : i32
    %c0_i32_0 = arith.constant 0 : i32
    %c0_i32_1 = arith.constant 0 : i32
    return %c0_i32, %c0_i32_0 : i32, i32
  }
  func.func @transform_7(%arg0: i32) -> (i32, i32) {
    %c0_i32 = arith.constant 0 : i32
    %c0_i32_0 = arith.constant 0 : i32
    %c0_i32_1 = arith.constant 0 : i32
    return %c0_i32, %c0_i32_0 : i32, i32
  }
  func.func @transform_8(%arg0: i32) -> (i32, i32) {
    %c0_i32 = arith.constant 0 : i32
    %c0_i32_0 = arith.constant 0 : i32
    %c0_i32_1 = arith.constant 0 : i32
    return %c0_i32, %c0_i32_0 : i32, i32
  }
  func.func @transform_9(%arg0: i32) -> (i32, i32) {
    %c0_i32 = arith.constant 0 : i32
    %c0_i32_0 = arith.constant 0 : i32
    %c0_i32_1 = arith.constant 0 : i32
    return %c0_i32, %c0_i32_0 : i32, i32
  }
  func.func @transform_10(%arg0: i32) -> (i32, i32) {
    %c0_i32 = arith.constant 0 : i32
    %c0_i32_0 = arith.constant 0 : i32
    %c0_i32_1 = arith.constant 0 : i32
    return %c0_i32, %c0_i32_0 : i32, i32
  }
  func.func @transform_11(%arg0: i32) -> (i32, i32) {
    %c0_i32 = arith.constant 0 : i32
    %c0_i32_0 = arith.constant 0 : i32
    %c0_i32_1 = arith.constant 0 : i32
    return %c0_i32, %c0_i32_0 : i32, i32
  }
  func.func @transform_12(%arg0: i32) -> (i32, i32) {
    %c0_i32 = arith.constant 0 : i32
    %c0_i32_0 = arith.constant 0 : i32
    %c0_i32_1 = arith.constant 0 : i32
    return %c0_i32, %c0_i32_0 : i32, i32
  }
  func.func @transform_13(%arg0: i32) -> (i32, i32) {
    %c0_i32 = arith.constant 0 : i32
    %c0_i32_0 = arith.constant 0 : i32
    %c0_i32_1 = arith.constant 0 : i32
    return %c0_i32, %c0_i32_0 : i32, i32
  }
  func.func @transform_14(%arg0: i32) -> (i32, i32) {
    %c0_i32 = arith.constant 0 : i32
    %c0_i32_0 = arith.constant 0 : i32
    %c0_i32_1 = arith.constant 0 : i32
    return %c0_i32, %c0_i32_0 : i32, i32
  }
  func.func @transform_15(%arg0: i32) -> (i32, i32) {
    %c0_i32 = arith.constant 0 : i32
    %c0_i32_0 = arith.constant 0 : i32
    %c0_i32_1 = arith.constant 0 : i32
    return %c0_i32, %c0_i32_0 : i32, i32
  }
  func.func @transform_16(%arg0: i32) -> (i32, i32) {
    %c0_i32 = arith.constant 0 : i32
    %c0_i32_0 = arith.constant 0 : i32
    return %arg0, %c0_i32 : i32, i32
  }
}

</mosaic_0001>

<llo_original>
// kernel: tpu_custom_call.1
$region0: #{tpu_custom_call.1}
  #allocation0 [shape = 'u32[]', space=smem, size = 0x4, offset = 0x4, fixed_abs, tag = 'smem constant byte address 0x4 - core index']
  #allocation1 [shape = 'u32[144,128]{1,0:T(1,128)}', space=vmem, size = 0x12000, scoped, tag = 'internal scratch']
  #allocation2 [shape = 'bf16[16,128]{1,0:T(8,128)(2,1)}', space=vmem, size = 0x1000, scoped, tag = 'scratch operand']
  #allocation3 [shape = 'bf16[16,128]{1,0:T(8,128)(2,1)}', space=vmem, size = 0x1000, scoped, tag = 'scratch operand']
  %s0 = inlined_call_operand.vmem [shape: s32[14,1], index: 0, kind: input, shape index: {}]
  %s1 = inlined_call_operand.vmem [shape: s32[14,1], index: 1, kind: input, shape index: {}]
  %s2 = inlined_call_operand.hbm [shape: f32[14,64], index: 2, kind: input, shape index: {}]
  %s3 = inlined_call_operand.hbm [shape: f32[11,64], index: 3, kind: input, shape index: {}]
  %s4 = inlined_call_operand.vmem [shape: bf16[64,128], index: 4, kind: input, shape index: {}]
  %s5 = inlined_call_operand.vmem [shape: f32[1,128], index: 5, kind: input, shape index: {}]
  %s6 = inlined_call_operand.hbm [shape: bf16[128,128], index: 6, kind: input, shape index: {}]
  %s7 = inlined_call_operand.vmem [shape: f32[1,128], index: 7, kind: input, shape index: {}]
  %s8 = inlined_call_operand.hbm [shape: bf16[128,128], index: 8, kind: input, shape index: {}]
  %s9 = inlined_call_operand.hbm [shape: bf16[128,128], index: 9, kind: input, shape index: {}]
  %s10 = inlined_call_operand.hbm [shape: bf16[64,128], index: 10, kind: input, shape index: {}]
  %s11 = inlined_call_operand.vmem [shape: f32[1,128], index: 11, kind: input, shape index: {}]
  %s12 = inlined_call_operand.vmem [shape: f32[1,128], index: 12, kind: input, shape index: {}]
  %s13 = inlined_call_operand.hbm [shape: bf16[128,128], index: 13, kind: input, shape index: {}]
  %s14 = inlined_call_operand.vmem [shape: f32[1,128], index: 14, kind: input, shape index: {}]
  %s15 = inlined_call_operand.hbm [shape: f32[16,128], index: 15, kind: output, shape index: {0}]
  %s16 = inlined_call_operand.hbm [shape: f32[128,128], index: 16, kind: output, shape index: {1}]
  %17 = xla_tuple %s15, %s16
  %s18 = sld [smem:[#allocation0]]
  $region110: #{tpu_custom_call.1} parent=0
    _
  %s20 = ssub.s32 1, %s18
  %s21 = scalar_select 0, %s20, %s18
  $region1: #{tpu_custom_call.1} parent=0
    #allocation4 [shape = 'u8[65536]{0}', space=vmem, size = 0x10000, scoped, tag = 'input window, operand 2, single buffered']
    #allocation5 [shape = 's32[1]{0}', space=sflag, size = 0x4, scoped, tag = 'scoped memory for tpu_custom_call.1']
    #allocation6 [shape = 's32[1]{0}', space=sflag, size = 0x4, scoped, tag = 'scoped memory for tpu_custom_call.1']
    #allocation7 [shape = 'u8[8192]{0}', space=vmem, size = 0x2000, scoped, tag = 'input window, operand 3, single buffered']
    #allocation8 [shape = 's32[1]{0}', space=sflag, size = 0x4, scoped, tag = 'scoped memory for tpu_custom_call.1']
    #allocation9 [shape = 'u8[32768]{0}', space=vmem, size = 0x8000, scoped, tag = 'input window, operand 6, single buffered']
    #allocation10 [shape = 'u8[32768]{0}', space=vmem, size = 0x8000, scoped, tag = 'input window, operand 8, single buffered']
    #allocation11 [shape = 's32[1]{0}', space=sflag, size = 0x4, scoped, tag = 'scoped memory for tpu_custom_call.1']
    #allocation12 [shape = 'u8[32768]{0}', space=vmem, size = 0x8000, scoped, tag = 'input window, operand 9, single buffered']
    #allocation13 [shape = 'u8[16384]{0}', space=vmem, size = 0x4000, scoped, tag = 'input window, operand 10, single buffered']
    #allocation14 [shape = 's32[1]{0}', space=sflag, size = 0x4, scoped, tag = 'scoped memory for tpu_custom_call.1']
    #allocation15 [shape = 'u8[32768]{0}', space=vmem, size = 0x8000, scoped, tag = 'input window, operand 13, single buffered']
    #allocation16 [shape = 'u8[8192]{0}', space=vmem, size = 0x2000, scoped, tag = 'output window, operand 0, single buffered']
    #allocation17 [shape = 'u8[65536]{0}', space=vmem, size = 0x10000, scoped, tag = 'output window, operand 1, single buffered']
    #allocation18 [shape = 's32[1]{0}', space=sflag, size = 0x4, scoped, tag = 'scoped memory for tpu_custom_call.1']
    %22 = vsyncpa [#allocation5], 0
    %23 = vsyncpa [#allocation8], 0
    %24 = vsyncpa [#allocation11], 0
    %25 = vsyncpa [#allocation14], 0
    %26 = vsyncpa [#allocation6], 0
    %27 = vsyncpa [#allocation18], 0
    // Predicated region
    $region2: #{tpu_custom_call.1} parent=1 // pred_check
      _
    $region3: #{tpu_custom_call.1} parent=1 // pred_check_branch
      %29 = sbr.rel (0) target = $region5
    $region4: #{tpu_custom_call.1} parent=1 // pred_region
      _
    $region5: #{tpu_custom_call.1} parent=1 // pred_fallthru
      _
    // Predicated region
    $region6: #{tpu_custom_call.1} parent=1 // pred_check
      _
    $region7: #{tpu_custom_call.1} parent=1 // pred_check_branch
      %31 = sbr.rel (0) target = $region9
    $region8: #{tpu_custom_call.1} parent=1 // pred_region
      _
    $region9: #{tpu_custom_call.1} parent=1 // pred_fallthru
      _
    // Predicated region
    $region10: #{tpu_custom_call.1} parent=1 // pred_check
      _
    $region11: #{tpu_custom_call.1} parent=1 // pred_check_branch
      %33 = sbr.rel (0) target = $region13
    $region12: #{tpu_custom_call.1} parent=1 // pred_region
      %s35 = ssub.s32 2048, 256
      %36 = vsyncadd [#allocation5], %s35
      %s37 = sshll.u32 [#allocation4], 4
      %s38 = int_to_ptr.vmem [resolvable:$true] %s37
      %43 = dma.hbm_to_vmem [thread:$0]  %s2, 256, %s38, [#allocation5], 128, 128, 8
    $region13: #{tpu_custom_call.1} parent=1 // pred_fallthru
      _
    // Predicated region
    $region14: #{tpu_custom_call.1} parent=1 // pred_check
      _
    $region15: #{tpu_custom_call.1} parent=1 // pred_check_branch
      %45 = sbr.rel (0) target = $region17
    $region16: #{tpu_custom_call.1} parent=1 // pred_region
      %s47 = ssub.s32 256, 256
      %48 = vsyncadd [#allocation8], %s47
      %s49 = sshll.u32 [#allocation7], 4
      %s50 = int_to_ptr.vmem [resolvable:$true] %s49
      %55 = dma.hbm_to_vmem [thread:$0]  %s3, 256, %s50, [#allocation8], 128, 128, 8
    $region17: #{tpu_custom_call.1} parent=1 // pred_fallthru
      _
    // Predicated region
    $region18: #{tpu_custom_call.1} parent=1 // pred_check
      _
    $region19: #{tpu_custom_call.1} parent=1 // pred_check_branch
      %57 = sbr.rel (0) target = $region21
    $region20: #{tpu_custom_call.1} parent=1 // pred_region
      _
    $region21: #{tpu_custom_call.1} parent=1 // pred_fallthru
      _
    // Predicated region
    $region22: #{tpu_custom_call.1} parent=1 // pred_check
      _
    $region23: #{tpu_custom_call.1} parent=1 // pred_check_branch
      %59 = sbr.rel (0) target = $region25
    $region24: #{tpu_custom_call.1} parent=1 // pred_region
      _
    $region25: #{tpu_custom_call.1} parent=1 // pred_fallthru
      _
    // Predicated region
    $region26: #{tpu_custom_call.1} parent=1 // pred_check
      _
    $region27: #{tpu_custom_call.1} parent=1 // pred_check_branch
      %61 = sbr.rel (0) target = $region29
    $region28: #{tpu_custom_call.1} parent=1 // pred_region
      %s63 = ssub.s32 1024, 1024
      %64 = vsyncadd [#allocation8], %s63
      %s65 = sshll.u32 [#allocation9], 4
      %s66 = int_to_ptr.vmem [resolvable:$true] %s65
      %71 = dma.hbm_to_vmem [thread:$0]  %s6, 1024, %s66, [#allocation8], 64, 64, 4
    $region29: #{tpu_custom_call.1} parent=1 // pred_fallthru
      _
    // Predicated region
    $region30: #{tpu_custom_call.1} parent=1 // pred_check
      _
    $region31: #{tpu_custom_call.1} parent=1 // pred_check_branch
      %73 = sbr.rel (0) target = $region33
    $region32: #{tpu_custom_call.1} parent=1 // pred_region
      _
    $region33: #{tpu_custom_call.1} parent=1 // pred_fallthru
      _
    // Predicated region
    $region34: #{tpu_custom_call.1} parent=1 // pred_check
      _
    $region35: #{tpu_custom_call.1} parent=1 // pred_check_branch
      %75 = sbr.rel (0) target = $region37
    $region36: #{tpu_custom_call.1} parent=1 // pred_region
      %s77 = ssub.s32 1024, 1024
      %78 = vsyncadd [#allocation11], %s77
      %s79 = sshll.u32 [#allocation10], 4
      %s80 = int_to_ptr.vmem [resolvable:$true] %s79
      %85 = dma.hbm_to_vmem [thread:$0]  %s8, 1024, %s80, [#allocation11], 64, 64, 4
    $region37: #{tpu_custom_call.1} parent=1 // pred_fallthru
      _
    // Predicated region
    $region38: #{tpu_custom_call.1} parent=1 // pred_check
      _
    $region39: #{tpu_custom_call.1} parent=1 // pred_check_branch
      %87 = sbr.rel (0) target = $region41
    $region40: #{tpu_custom_call.1} parent=1 // pred_region
      %s89 = ssub.s32 1024, 1024
      %90 = vsyncadd [#allocation11], %s89
      %s91 = sshll.u32 [#allocation12], 4
      %s92 = int_to_ptr.vmem [resolvable:$true] %s91
      %97 = dma.hbm_to_vmem [thread:$0]  %s9, 1024, %s92, [#allocation11], 64, 64, 4
    $region41: #{tpu_custom_call.1} parent=1 // pred_fallthru
      _
    // Predicated region
    $region42: #{tpu_custom_call.1} parent=1 // pred_check
      _
    $region43: #{tpu_custom_call.1} parent=1 // pred_check_branch
      %99 = sbr.rel (0) target = $region45
    $region44: #{tpu_custom_call.1} parent=1 // pred_region
      %s101 = ssub.s32 512, 512
      %102 = vsyncadd [#allocation14], %s101
      %s103 = sshll.u32 [#allocation13], 4
      %s104 = int_to_ptr.vmem [resolvable:$true] %s103
      %109 = dma.hbm_to_vmem [thread:$0]  %s10, 512, %s104, [#allocation14], 64, 64, 4
    $region45: #{tpu_custom_call.1} parent=1 // pred_fallthru
      _
    // Predicated region
    $region46: #{tpu_custom_call.1} parent=1 // pred_check
      _
    $region47: #{tpu_custom_call.1} parent=1 // pred_check_branch
      %111 = sbr.rel (0) target = $region49
    $region48: #{tpu_custom_call.1} parent=1 // pred_region
      _
    $region49: #{tpu_custom_call.1} parent=1 // pred_fallthru
      _
    // Predicated region
    $region50: #{tpu_custom_call.1} parent=1 // pred_check
      _
    $region51: #{tpu_custom_call.1} parent=1 // pred_check_branch
      %113 = sbr.rel (0) target = $region53
    $region52: #{tpu_custom_call.1} parent=1 // pred_region
      _
    $region53: #{tpu_custom_call.1} parent=1 // pred_fallthru
      _
    // Predicated region
    $region54: #{tpu_custom_call.1} parent=1 // pred_check
      _
    $region55: #{tpu_custom_call.1} parent=1 // pred_check_branch
      %115 = sbr.rel (0) target = $region57
    $region56: #{tpu_custom_call.1} parent=1 // pred_region
      %s117 = ssub.s32 1024, 1024
      %118 = vsyncadd [#allocation14], %s117
      %s119 = sshll.u32 [#allocation15], 4
      %s120 = int_to_ptr.vmem [resolvable:$true] %s119
      %125 = dma.hbm_to_vmem [thread:$0]  %s13, 1024, %s120, [#allocation14], 64, 64, 4
    $region57: #{tpu_custom_call.1} parent=1 // pred_fallthru
      _
    // Predicated region
    $region58: #{tpu_custom_call.1} parent=1 // pred_check
      _
    $region59: #{tpu_custom_call.1} parent=1 // pred_check_branch
      %127 = sbr.rel (0) target = $region61
    $region60: #{tpu_custom_call.1} parent=1 // pred_region
      _
    $region61: #{tpu_custom_call.1} parent=1 // pred_fallthru
      _
    // Predicated region
    $region62: #{tpu_custom_call.1} parent=1 // pred_check
      _
    $region63: #{tpu_custom_call.1} parent=1 // pred_check_branch
      %129 = sbr.rel (0) target = $region65
    $region64: #{tpu_custom_call.1} parent=1 // pred_region
      %130 = dma.done [#allocation5], 2048
    $region65: #{tpu_custom_call.1} parent=1 // pred_fallthru
      _
    // Predicated region
    $region66: #{tpu_custom_call.1} parent=1 // pred_check
      _
    $region67: #{tpu_custom_call.1} parent=1 // pred_check_branch
      %132 = sbr.rel (0) target = $region69
    $region68: #{tpu_custom_call.1} parent=1 // pred_region
      %133 = dma.done [#allocation8], 256
    $region69: #{tpu_custom_call.1} parent=1 // pred_fallthru
      _
    // Predicated region
    $region70: #{tpu_custom_call.1} parent=1 // pred_check
      _
    $region71: #{tpu_custom_call.1} parent=1 // pred_check_branch
      %135 = sbr.rel (0) target = $region73
    $region72: #{tpu_custom_call.1} parent=1 // pred_region
      %136 = dma.done [#allocation8], 1024
    $region73: #{tpu_custom_call.1} parent=1 // pred_fallthru
      _
    // Predicated region
    $region74: #{tpu_custom_call.1} parent=1 // pred_check
      _
    $region75: #{tpu_custom_call.1} parent=1 // pred_check_branch
      %138 = sbr.rel (0) target = $region77
    $region76: #{tpu_custom_call.1} parent=1 // pred_region
      %139 = dma.done [#allocation11], 1024
    $region77: #{tpu_custom_call.1} parent=1 // pred_fallthru
      _
    // Predicated region
    $region78: #{tpu_custom_call.1} parent=1 // pred_check
      _
    $region79: #{tpu_custom_call.1} parent=1 // pred_check_branch
      %141 = sbr.rel (0) target = $region81
    $region80: #{tpu_custom_call.1} parent=1 // pred_region
      %142 = dma.done [#allocation11], 1024
    $region81: #{tpu_custom_call.1} parent=1 // pred_fallthru
      _
    // Predicated region
    $region82: #{tpu_custom_call.1} parent=1 // pred_check
      _
    $region83: #{tpu_custom_call.1} parent=1 // pred_check_branch
      %144 = sbr.rel (0) target = $region85
    $region84: #{tpu_custom_call.1} parent=1 // pred_region
      %145 = dma.done [#allocation14], 512
    $region85: #{tpu_custom_call.1} parent=1 // pred_fallthru
      _
    // Predicated region
    $region86: #{tpu_custom_call.1} parent=1 // pred_check
      _
    $region87: #{tpu_custom_call.1} parent=1 // pred_check_branch
      %147 = sbr.rel (0) target = $region89
    $region88: #{tpu_custom_call.1} parent=1 // pred_region
      %148 = dma.done [#allocation14], 1024
    $region89: #{tpu_custom_call.1} parent=1 // pred_fallthru
      _
    %p150 = scmp.eq.s32.totalorder 0, 0
    // Predicated region
    $region90: #{tpu_custom_call.1} parent=1 // pred_check
      %p151 = pneg %p150
    $region91: #{tpu_custom_call.1} parent=1 // pred_check_branch
      %153 = sbr.rel (%p151) target = $region93
    $region92: #{tpu_custom_call.1} parent=1 // pred_region
      %v154 = vlaneseq
      %v155 = vshrl.u32 %v154, 7
      %v156 = vadd.s32 %v155, 8
      %vm157 = vcmp.lt.s32.totalorder %v155, 11
      %vm158 = vcmp.lt.s32.totalorder %v156, 11
      %v159 = vld [vmem:[#allocation7] sm:$0xff]
      %v160 = vld [vmem:[#allocation7 + $0x8] sm:$0xff]
      %v161 = vsel %vm157, 1, 0
      %v162 = vsel %vm158, 1, 0
      %vm163 = vcmp.eq.s32.totalorder %v161, 1
      %vm164 = vcmp.eq.s32.totalorder %v162, 1
      %v165 = vsel %vm163, %v159, 0.0
      %v166 = vsel %vm164, %v160, 0.0
      %v167 = vpack.c.bf16 %v166, %v165
      %v168 = vld [vmem:[%s4] sm:$0xf]
      %v169 = vld [vmem:[%s4 + $0x4] sm:$0xf]
      %v170 = vld [vmem:[%s4 + $0x8] sm:$0xf]
      %v171 = vld [vmem:[%s4 + $0xc] sm:$0xf]
      %v172 = vld [vmem:[%s4 + $0x10] sm:$0xf]
      %v173 = vld [vmem:[%s4 + $0x14] sm:$0xf]
      %v174 = vld [vmem:[%s4 + $0x18] sm:$0xf]
      %v175 = vld [vmem:[%s4 + $0x1c] sm:$0xf]
      %v176 = vld [vmem:[%s5] sm:$0x1]
      %v178 = vlaneseq
      %v179 = vshrl.u32 %v178, 7
      %v180 = vsub.s32 0, %v179
      %v181 = vrot.slane %v176, %v180
      %v191 = vunpack.c.l.b16 %v168
      %v192 = vunpack.c.l.b16 %v169
      %v193 = vunpack.c.l.b16 %v170
      %v194 = vunpack.c.l.b16 %v171
      %v195 = vunpack.c.l.b16 %v172
      %v196 = vunpack.c.l.b16 %v173
      %v197 = vunpack.c.l.b16 %v174
      %v198 = vunpack.c.l.b16 %v175
      %v199 = vpack.c.b16 %v192, %v191
      %v200 = vpack.c.b16 %v194, %v193
      %v201 = vpack.c.b16 %v196, %v195
      %v202 = vpack.c.b16 %v198, %v197
      %vm207 = vcmask 523264
      %v209 = vsel %vm207, %v167, 0
      %211 = vmatprep.subr.bf16.mxu0 0
      %212 = vmatpush1.bf16.msra.mxu0 0
      %213 = vmatprep.subr.bf16.mxu0 0
      %214 = vmatpush1.bf16.msra.mxu0 0
      %215 = vmatprep.subr.bf16.mxu0 0
      %216 = vmatpush1.bf16.msra.mxu0 0
      %217 = vmatprep.subr.bf16.mxu0 0
      %218 = vmatpush1.bf16.msra.mxu0 0
      %219 = vmatprep.subr.bf16.mxu0 0
      %220 = vmatpush1.bf16.msra.mxu0 %v202
      %221 = vmatprep.subr.bf16.mxu0 0
      %222 = vmatpush1.bf16.msra.mxu0 %v201
      %223 = vmatprep.subr.bf16.mxu0 0
      %224 = vmatpush1.bf16.msra.mxu0 %v200
      %225 = vmatprep.subr.bf16.mxu0 0
      %226 = vmatpush1.bf16.msra.mxu0 %v199
      %227 = vmatprep.subr.bf16.mxu0 0
      %228 = vmatpush2.bf16.msra.mxu0 0
      %229 = vmatprep.subr.bf16.mxu0 0
      %230 = vmatpush2.bf16.msra.mxu0 0
      %231 = vmatprep.subr.bf16.mxu0 0
      %232 = vmatpush2.bf16.msra.mxu0 0
      %233 = vmatprep.subr.bf16.mxu0 0
      %234 = vmatpush2.bf16.msra.mxu0 0
      %235 = vmatprep.subr.bf16.mxu0 0
      %236 = vmatpush2.bf16.msra.mxu0 0
      %237 = vmatprep.subr.bf16.mxu0 0
      %238 = vmatpush2.bf16.msra.mxu0 0
      %239 = vmatprep.subr.bf16.mxu0 0
      %240 = vmatpush2.bf16.msra.mxu0 0
      %241 = vmatprep.subr.bf16.mxu0 0
      %242 = vmatpush2.bf16.msra.mxu0 0
      %243 = vmatprep.mubr.bf16.mxu0 0
      %244 = vmatmul.mubr.bf16.gmra.mxu0 %v209
      %v245 = vpop.f32.mrf.mxu0
      %v246 = vadd.f32 %v181, %v245
      %v247 = vpop.f32.mrf.mxu0
      %v248 = vpop.f32.mrf.mxu0
      %v249 = vadd.f32 %v181, %v248
      %v250 = vpop.f32.mrf.mxu0
      %251 = vdwg.mxu0
      %v252 = vmax.f32 %v246, 0.0
      %v253 = vmax.f32 %v249, 0.0
      %v254 = vpack.c.bf16 %v253, %v252
      %v255 = vld [vmem:[#allocation9] sm:$0xf]
      %v256 = vld [vmem:[#allocation9 + $0x4] sm:$0xf]
      %v257 = vld [vmem:[#allocation9 + $0x8] sm:$0xf]
      %v258 = vld [vmem:[#allocation9 + $0xc] sm:$0xf]
      %v259 = vld [vmem:[#allocation9 + $0x10] sm:$0xf]
      %v260 = vld [vmem:[#allocation9 + $0x14] sm:$0xf]
      %v261 = vld [vmem:[#allocation9 + $0x18] sm:$0xf]
      %v262 = vld [vmem:[#allocation9 + $0x1c] sm:$0xf]
      %v263 = vld [vmem:[#allocation9 + $0x20] sm:$0xf]
      %v264 = vld [vmem:[#allocation9 + $0x24] sm:$0xf]
      %v265 = vld [vmem:[#allocation9 + $0x28] sm:$0xf]
      %v266 = vld [vmem:[#allocation9 + $0x2c] sm:$0xf]
      %v267 = vld [vmem:[#allocation9 + $0x30] sm:$0xf]
      %v268 = vld [vmem:[#allocation9 + $0x34] sm:$0xf]
      %v269 = vld [vmem:[#allocation9 + $0x38] sm:$0xf]
      %v270 = vld [vmem:[#allocation9 + $0x3c] sm:$0xf]
      %v271 = vld [vmem:[%s7] sm:$0x1]
      %v273 = vlaneseq
      %v274 = vshrl.u32 %v273, 7
      %v275 = vsub.s32 0, %v274
      %v276 = vrot.slane %v271, %v275
      %v294 = vunpack.c.l.b16 %v255
      %v295 = vunpack.c.l.b16 %v256
      %v296 = vunpack.c.l.b16 %v257
      %v297 = vunpack.c.l.b16 %v258
      %v298 = vunpack.c.l.b16 %v259
      %v299 = vunpack.c.l.b16 %v260
      %v300 = vunpack.c.l.b16 %v261
      %v301 = vunpack.c.l.b16 %v262
      %v302 = vunpack.c.l.b16 %v263
      %v303 = vunpack.c.l.b16 %v264
      %v304 = vunpack.c.l.b16 %v265
      %v305 = vunpack.c.l.b16 %v266
      %v306 = vunpack.c.l.b16 %v267
      %v307 = vunpack.c.l.b16 %v268
      %v308 = vunpack.c.l.b16 %v269
      %v309 = vunpack.c.l.b16 %v270
      %v310 = vpack.c.b16 %v295, %v294
      %v311 = vpack.c.b16 %v297, %v296
      %v312 = vpack.c.b16 %v299, %v298
      %v313 = vpack.c.b16 %v301, %v300
      %v314 = vpack.c.b16 %v303, %v302
      %v315 = vpack.c.b16 %v305, %v304
      %v316 = vpack.c.b16 %v307, %v306
      %v317 = vpack.c.b16 %v309, %v308
      %326 = vmatprep.subr.bf16.mxu0 0
      %327 = vmatpush1.bf16.msra.mxu0 %v317
      %328 = vmatprep.subr.bf16.mxu0 0
      %329 = vmatpush1.bf16.msra.mxu0 %v316
      %330 = vmatprep.subr.bf16.mxu0 0
      %331 = vmatpush1.bf16.msra.mxu0 %v315
      %332 = vmatprep.subr.bf16.mxu0 0
      %333 = vmatpush1.bf16.msra.mxu0 %v314
      %334 = vmatprep.subr.bf16.mxu0 0
      %335 = vmatpush1.bf16.msra.mxu0 %v313
      %336 = vmatprep.subr.bf16.mxu0 0
      %337 = vmatpush1.bf16.msra.mxu0 %v312
      %338 = vmatprep.subr.bf16.mxu0 0
      %339 = vmatpush1.bf16.msra.mxu0 %v311
      %340 = vmatprep.subr.bf16.mxu0 0
      %341 = vmatpush1.bf16.msra.mxu0 %v310
      %342 = vmatprep.subr.bf16.mxu0 0
      %343 = vmatpush2.bf16.msra.mxu0 0
      %344 = vmatprep.subr.bf16.mxu0 0
      %345 = vmatpush2.bf16.msra.mxu0 0
      %346 = vmatprep.subr.bf16.mxu0 0
      %347 = vmatpush2.bf16.msra.mxu0 0
      %348 = vmatprep.subr.bf16.mxu0 0
      %349 = vmatpush2.bf16.msra.mxu0 0
      %350 = vmatprep.subr.bf16.mxu0 0
      %351 = vmatpush2.bf16.msra.mxu0 0
      %352 = vmatprep.subr.bf16.mxu0 0
      %353 = vmatpush2.bf16.msra.mxu0 0
      %354 = vmatprep.subr.bf16.mxu0 0
      %355 = vmatpush2.bf16.msra.mxu0 0
      %356 = vmatprep.subr.bf16.mxu0 0
      %357 = vmatpush2.bf16.msra.mxu0 0
      %358 = vmatprep.mubr.bf16.mxu0 0
      %359 = vmatmul.mubr.bf16.gmra.mxu0 %v254
      %v360 = vpop.f32.mrf.mxu0
      %v361 = vadd.f32 %v276, %v360
      %v362 = vpop.f32.mrf.mxu0
      %v363 = vpop.f32.mrf.mxu0
      %v364 = vadd.f32 %v276, %v363
      %v365 = vpop.f32.mrf.mxu0
      %366 = vdwg.mxu0
      %367 = vst [vmem:[#allocation16] sm:$0xff] %v361
      %368 = vst [vmem:[#allocation16 + $0x8] sm:$0xff] %v364
      %v369 = vld [vmem:[#allocation10] sm:$0xf]
      %v370 = vld [vmem:[#allocation10 + $0x4] sm:$0xf]
      %v371 = vld [vmem:[#allocation10 + $0x8] sm:$0xf]
      %v372 = vld [vmem:[#allocation10 + $0xc] sm:$0xf]
      %v373 = vld [vmem:[#allocation10 + $0x10] sm:$0xf]
      %v374 = vld [vmem:[#allocation10 + $0x14] sm:$0xf]
      %v375 = vld [vmem:[#allocation10 + $0x18] sm:$0xf]
      %v376 = vld [vmem:[#allocation10 + $0x1c] sm:$0xf]
      %v377 = vld [vmem:[#allocation10 + $0x20] sm:$0xf]
      %v378 = vld [vmem:[#allocation10 + $0x24] sm:$0xf]
      %v379 = vld [vmem:[#allocation10 + $0x28] sm:$0xf]
      %v380 = vld [vmem:[#allocation10 + $0x2c] sm:$0xf]
      %v381 = vld [vmem:[#allocation10 + $0x30] sm:$0xf]
      %v382 = vld [vmem:[#allocation10 + $0x34] sm:$0xf]
      %v383 = vld [vmem:[#allocation10 + $0x38] sm:$0xf]
      %v384 = vld [vmem:[#allocation10 + $0x3c] sm:$0xf]
      %v401 = vunpack.c.l.b16 %v369
      %v402 = vunpack.c.l.b16 %v370
      %v403 = vunpack.c.l.b16 %v371
      %v404 = vunpack.c.l.b16 %v372
      %v405 = vunpack.c.l.b16 %v373
      %v406 = vunpack.c.l.b16 %v374
      %v407 = vunpack.c.l.b16 %v375
      %v408 = vunpack.c.l.b16 %v376
      %v409 = vunpack.c.l.b16 %v377
      %v410 = vunpack.c.l.b16 %v378
      %v411 = vunpack.c.l.b16 %v379
      %v412 = vunpack.c.l.b16 %v380
      %v413 = vunpack.c.l.b16 %v381
      %v414 = vunpack.c.l.b16 %v382
      %v415 = vunpack.c.l.b16 %v383
      %v416 = vunpack.c.l.b16 %v384
      %v417 = vpack.c.b16 %v402, %v401
      %v418 = vpack.c.b16 %v404, %v403
      %v419 = vpack.c.b16 %v406, %v405
      %v420 = vpack.c.b16 %v408, %v407
      %v421 = vpack.c.b16 %v410, %v409
      %v422 = vpack.c.b16 %v412, %v411
      %v423 = vpack.c.b16 %v414, %v413
      %v424 = vpack.c.b16 %v416, %v415
      %433 = vmatprep.subr.bf16.mxu0 0
      %434 = vmatpush1.bf16.msra.mxu0 %v424
      %435 = vmatprep.subr.bf16.mxu0 0
      %436 = vmatpush1.bf16.msra.mxu0 %v423
      %437 = vmatprep.subr.bf16.mxu0 0
      %438 = vmatpush1.bf16.msra.mxu0 %v422
      %439 = vmatprep.subr.bf16.mxu0 0
      %440 = vmatpush1.bf16.msra.mxu0 %v421
      %441 = vmatprep.subr.bf16.mxu0 0
      %442 = vmatpush1.bf16.msra.mxu0 %v420
      %443 = vmatprep.subr.bf16.mxu0 0
      %444 = vmatpush1.bf16.msra.mxu0 %v419
      %445 = vmatprep.subr.bf16.mxu0 0
      %446 = vmatpush1.bf16.msra.mxu0 %v418
      %447 = vmatprep.subr.bf16.mxu0 0
      %448 = vmatpush1.bf16.msra.mxu0 %v417
      %449 = vmatprep.subr.bf16.mxu0 0
      %450 = vmatpush2.bf16.msra.mxu0 0
      %451 = vmatprep.subr.bf16.mxu0 0
      %452 = vmatpush2.bf16.msra.mxu0 0
      %453 = vmatprep.subr.bf16.mxu0 0
      %454 = vmatpush2.bf16.msra.mxu0 0
      %455 = vmatprep.subr.bf16.mxu0 0
      %456 = vmatpush2.bf16.msra.mxu0 0
      %457 = vmatprep.subr.bf16.mxu0 0
      %458 = vmatpush2.bf16.msra.mxu0 0
      %459 = vmatprep.subr.bf16.mxu0 0
      %460 = vmatpush2.bf16.msra.mxu0 0
      %461 = vmatprep.subr.bf16.mxu0 0
      %462 = vmatpush2.bf16.msra.mxu0 0
      %463 = vmatprep.subr.bf16.mxu0 0
      %464 = vmatpush2.bf16.msra.mxu0 0
      %465 = vmatprep.mubr.bf16.mxu0 0
      %466 = vmatmul.mubr.bf16.gmra.mxu0 %v254
      %v467 = vpop.f32.mrf.mxu0
      %v468 = vadd.f32 0.0, %v467
      %v469 = vpop.f32.mrf.mxu0
      %v470 = vpop.f32.mrf.mxu0
      %v471 = vadd.f32 0.0, %v470
      %v472 = vpop.f32.mrf.mxu0
      %473 = vdwg.mxu0
      %v474 = vpack.c.bf16 %v471, %v468
      %v476 = vunpack.c.l.b16 %v474
      %v477 = vunpack.c.h.b16 %v474
      %v478 = vpack.c.b16 %v476, %v476
      %v479 = vpack.c.b16 %v477, %v477
      %482 = vst [vmem:[#allocation2] sm:$0xf] %v478
      %483 = vst [vmem:[#allocation2 + $0x4] sm:$0xf] %v479
      %v484 = vld [vmem:[#allocation12] sm:$0xf]
      %v485 = vld [vmem:[#allocation12 + $0x4] sm:$0xf]
      %v486 = vld [vmem:[#allocation12 + $0x8] sm:$0xf]
      %v487 = vld [vmem:[#allocation12 + $0xc] sm:$0xf]
      %v488 = vld [vmem:[#allocation12 + $0x10] sm:$0xf]
      %v489 = vld [vmem:[#allocation12 + $0x14] sm:$0xf]
      %v490 = vld [vmem:[#allocation12 + $0x18] sm:$0xf]
      %v491 = vld [vmem:[#allocation12 + $0x1c] sm:$0xf]
      %v492 = vld [vmem:[#allocation12 + $0x20] sm:$0xf]
      %v493 = vld [vmem:[#allocation12 + $0x24] sm:$0xf]
      %v494 = vld [vmem:[#allocation12 + $0x28] sm:$0xf]
      %v495 = vld [vmem:[#allocation12 + $0x2c] sm:$0xf]
      %v496 = vld [vmem:[#allocation12 + $0x30] sm:$0xf]
      %v497 = vld [vmem:[#allocation12 + $0x34] sm:$0xf]
      %v498 = vld [vmem:[#allocation12 + $0x38] sm:$0xf]
      %v499 = vld [vmem:[#allocation12 + $0x3c] sm:$0xf]
      %v516 = vunpack.c.l.b16 %v484
      %v517 = vunpack.c.l.b16 %v485
      %v518 = vunpack.c.l.b16 %v486
      %v519 = vunpack.c.l.b16 %v487
      %v520 = vunpack.c.l.b16 %v488
      %v521 = vunpack.c.l.b16 %v489
      %v522 = vunpack.c.l.b16 %v490
      %v523 = vunpack.c.l.b16 %v491
      %v524 = vunpack.c.l.b16 %v492
      %v525 = vunpack.c.l.b16 %v493
      %v526 = vunpack.c.l.b16 %v494
      %v527 = vunpack.c.l.b16 %v495
      %v528 = vunpack.c.l.b16 %v496
      %v529 = vunpack.c.l.b16 %v497
      %v530 = vunpack.c.l.b16 %v498
      %v531 = vunpack.c.l.b16 %v499
      %v532 = vpack.c.b16 %v517, %v516
      %v533 = vpack.c.b16 %v519, %v518
      %v534 = vpack.c.b16 %v521, %v520
      %v535 = vpack.c.b16 %v523, %v522
      %v536 = vpack.c.b16 %v525, %v524
      %v537 = vpack.c.b16 %v527, %v526
      %v538 = vpack.c.b16 %v529, %v528
      %v539 = vpack.c.b16 %v531, %v530
      %548 = vmatprep.subr.bf16.mxu0 0
      %549 = vmatpush1.bf16.msra.mxu0 %v539
      %550 = vmatprep.subr.bf16.mxu0 0
      %551 = vmatpush1.bf16.msra.mxu0 %v538
      %552 = vmatprep.subr.bf16.mxu0 0
      %553 = vmatpush1.bf16.msra.mxu0 %v537
      %554 = vmatprep.subr.bf16.mxu0 0
      %555 = vmatpush1.bf16.msra.mxu0 %v536
      %556 = vmatprep.subr.bf16.mxu0 0
      %557 = vmatpush1.bf16.msra.mxu0 %v535
      %558 = vmatprep.subr.bf16.mxu0 0
      %559 = vmatpush1.bf16.msra.mxu0 %v534
      %560 = vmatprep.subr.bf16.mxu0 0
      %561 = vmatpush1.bf16.msra.mxu0 %v533
      %562 = vmatprep.subr.bf16.mxu0 0
      %563 = vmatpush1.bf16.msra.mxu0 %v532
      %564 = vmatprep.subr.bf16.mxu0 0
      %565 = vmatpush2.bf16.msra.mxu0 0
      %566 = vmatprep.subr.bf16.mxu0 0
      %567 = vmatpush2.bf16.msra.mxu0 0
      %568 = vmatprep.subr.bf16.mxu0 0
      %569 = vmatpush2.bf16.msra.mxu0 0
      %570 = vmatprep.subr.bf16.mxu0 0
      %571 = vmatpush2.bf16.msra.mxu0 0
      %572 = vmatprep.subr.bf16.mxu0 0
      %573 = vmatpush2.bf16.msra.mxu0 0
      %574 = vmatprep.subr.bf16.mxu0 0
      %575 = vmatpush2.bf16.msra.mxu0 0
      %576 = vmatprep.subr.bf16.mxu0 0
      %577 = vmatpush2.bf16.msra.mxu0 0
      %578 = vmatprep.subr.bf16.mxu0 0
      %579 = vmatpush2.bf16.msra.mxu0 0
      %580 = vmatprep.mubr.bf16.mxu0 0
      %581 = vmatmul.mubr.bf16.gmra.mxu0 %v254
      %v582 = vpop.f32.mrf.mxu0
      %v583 = vadd.f32 0.0, %v582
      %v584 = vpop.f32.mrf.mxu0
      %v585 = vpop.f32.mrf.mxu0
      %v586 = vadd.f32 0.0, %v585
      %v587 = vpop.f32.mrf.mxu0
      %588 = vdwg.mxu0
      %v589 = vpack.c.bf16 %v586, %v583
      %v591 = vunpack.c.l.b16 %v589
      %v592 = vunpack.c.h.b16 %v589
      %v593 = vpack.c.b16 %v591, %v591
      %v594 = vpack.c.b16 %v592, %v592
      %597 = vst [vmem:[#allocation3] sm:$0xf] %v593
      %598 = vst [vmem:[#allocation3 + $0x4] sm:$0xf] %v594
    $region93: #{tpu_custom_call.1} parent=1 // pred_fallthru
      _
    %v599 = vld [vmem:[#allocation4] sm:$0xff]
    %v600 = vld [vmem:[#allocation4 + $0x8] sm:$0xff]
    %v601 = vld [vmem:[#allocation4 + $0x10] sm:$0xff]
    %v602 = vld [vmem:[#allocation4 + $0x18] sm:$0xff]
    %v603 = vld [vmem:[#allocation4 + $0x20] sm:$0xff]
    %v604 = vld [vmem:[#allocation4 + $0x28] sm:$0xff]
    %v605 = vld [vmem:[#allocation4 + $0x30] sm:$0xff]
    %v606 = vld [vmem:[#allocation4 + $0x38] sm:$0xff]
    %v607 = vld [vmem:[#allocation4 + $0x40] sm:$0xff]
    %v608 = vld [vmem:[#allocation4 + $0x48] sm:$0xff]
    %v609 = vld [vmem:[#allocation4 + $0x50] sm:$0xff]
    %v610 = vld [vmem:[#allocation4 + $0x58] sm:$0xff]
    %v611 = vld [vmem:[#allocation4 + $0x60] sm:$0xff]
    %v612 = vld [vmem:[#allocation4 + $0x68] sm:$0xff]
    %v613 = vld [vmem:[#allocation4 + $0x70] sm:$0xff]
    %v614 = vld [vmem:[#allocation4 + $0x78] sm:$0xff]
    %v615 = vpack.c.bf16 %v600, %v599
    %v616 = vpack.c.bf16 %v602, %v601
    %v617 = vpack.c.bf16 %v604, %v603
    %v618 = vpack.c.bf16 %v606, %v605
    %v619 = vpack.c.bf16 %v608, %v607
    %v620 = vpack.c.bf16 %v610, %v609
    %v621 = vpack.c.bf16 %v612, %v611
    %v622 = vpack.c.bf16 %v614, %v613
    %v623 = vld [vmem:[#allocation13] sm:$0xf]
    %v624 = vld [vmem:[#allocation13 + $0x4] sm:$0xf]
    %v625 = vld [vmem:[#allocation13 + $0x8] sm:$0xf]
    %v626 = vld [vmem:[#allocation13 + $0xc] sm:$0xf]
    %v627 = vld [vmem:[#allocation13 + $0x10] sm:$0xf]
    %v628 = vld [vmem:[#allocation13 + $0x14] sm:$0xf]
    %v629 = vld [vmem:[#allocation13 + $0x18] sm:$0xf]
    %v630 = vld [vmem:[#allocation13 + $0x1c] sm:$0xf]
    %v631 = vld [vmem:[%s11] sm:$0x1]
    %v633 = vlaneseq
    %v634 = vshrl.u32 %v633, 7
    %v635 = vsub.s32 0, %v634
    %v636 = vrot.slane %v631, %v635
    %v646 = vunpack.c.l.b16 %v623
    %v647 = vunpack.c.l.b16 %v624
    %v648 = vunpack.c.l.b16 %v625
    %v649 = vunpack.c.l.b16 %v626
    %v650 = vunpack.c.l.b16 %v627
    %v651 = vunpack.c.l.b16 %v628
    %v652 = vunpack.c.l.b16 %v629
    %v653 = vunpack.c.l.b16 %v630
    %v654 = vpack.c.b16 %v647, %v646
    %v655 = vpack.c.b16 %v649, %v648
    %v656 = vpack.c.b16 %v651, %v650
    %v657 = vpack.c.b16 %v653, %v652
    %vm662 = vcmask 523264
    %v664 = vsel %vm662, %v615, 0
    %v667 = vsel %vm662, %v616, 0
    %v670 = vsel %vm662, %v617, 0
    %v673 = vsel %vm662, %v618, 0
    %v676 = vsel %vm662, %v619, 0
    %v679 = vsel %vm662, %v620, 0
    %v682 = vsel %vm662, %v621, 0
    %v685 = vsel %vm662, %v622, 0
    %687 = vmatprep.subr.bf16.mxu0 0
    %688 = vmatpush1.bf16.msra.mxu0 0
    %689 = vmatprep.subr.bf16.mxu0 0
    %690 = vmatpush1.bf16.msra.mxu0 0
    %691 = vmatprep.subr.bf16.mxu0 0
    %692 = vmatpush1.bf16.msra.mxu0 0
    %693 = vmatprep.subr.bf16.mxu0 0
    %694 = vmatpush1.bf16.msra.mxu0 0
    %695 = vmatprep.subr.bf16.mxu0 0
    %696 = vmatpush1.bf16.msra.mxu0 %v657
    %697 = vmatprep.subr.bf16.mxu0 0
    %698 = vmatpush1.bf16.msra.mxu0 %v656
    %699 = vmatprep.subr.bf16.mxu0 0
    %700 = vmatpush1.bf16.msra.mxu0 %v655
    %701 = vmatprep.subr.bf16.mxu0 0
    %702 = vmatpush1.bf16.msra.mxu0 %v654
    %703 = vmatprep.subr.bf16.mxu0 0
    %704 = vmatpush2.bf16.msra.mxu0 0
    %705 = vmatprep.subr.bf16.mxu0 0
    %706 = vmatpush2.bf16.msra.mxu0 0
    %707 = vmatprep.subr.bf16.mxu0 0
    %708 = vmatpush2.bf16.msra.mxu0 0
    %709 = vmatprep.subr.bf16.mxu0 0
    %710 = vmatpush2.bf16.msra.mxu0 0
    %711 = vmatprep.subr.bf16.mxu0 0
    %712 = vmatpush2.bf16.msra.mxu0 0
    %713 = vmatprep.subr.bf16.mxu0 0
    %714 = vmatpush2.bf16.msra.mxu0 0
    %715 = vmatprep.subr.bf16.mxu0 0
    %716 = vmatpush2.bf16.msra.mxu0 0
    %717 = vmatprep.subr.bf16.mxu0 0
    %718 = vmatpush2.bf16.msra.mxu0 0
    %719 = vmatprep.mubr.bf16.mxu0 0
    %720 = vmatmul.mubr.bf16.gmra.mxu0 %v664
    %v721 = vpop.f32.mrf.mxu0
    %v722 = vadd.f32 %v636, %v721
    %v723 = vpop.f32.mrf.mxu0
    %v724 = vpop.f32.mrf.mxu0
    %v725 = vadd.f32 %v636, %v724
    %v726 = vpop.f32.mrf.mxu0
    %727 = vmatprep.mubr.bf16.mxu0 0
    %728 = vmatmul.mubr.bf16.gmra.mxu0 %v667
    %v729 = vpop.f32.mrf.mxu0
    %v730 = vadd.f32 %v636, %v729
    %v731 = vpop.f32.mrf.mxu0
    %v732 = vpop.f32.mrf.mxu0
    %v733 = vadd.f32 %v636, %v732
    %v734 = vpop.f32.mrf.mxu0
    %735 = vmatprep.mubr.bf16.mxu0 0
    %736 = vmatmul.mubr.bf16.gmra.mxu0 %v670
    %v737 = vpop.f32.mrf.mxu0
    %v738 = vadd.f32 %v636, %v737
    %v739 = vpop.f32.mrf.mxu0
    %v740 = vpop.f32.mrf.mxu0
    %v741 = vadd.f32 %v636, %v740
    %v742 = vpop.f32.mrf.mxu0
    %743 = vmatprep.mubr.bf16.mxu0 0
    %744 = vmatmul.mubr.bf16.gmra.mxu0 %v673
    %v745 = vpop.f32.mrf.mxu0
    %v746 = vadd.f32 %v636, %v745
    %v747 = vpop.f32.mrf.mxu0
    %v748 = vpop.f32.mrf.mxu0
    %v749 = vadd.f32 %v636, %v748
    %v750 = vpop.f32.mrf.mxu0
    %751 = vmatprep.mubr.bf16.mxu0 0
    %752 = vmatmul.mubr.bf16.gmra.mxu0 %v676
    %v753 = vpop.f32.mrf.mxu0
    %v754 = vadd.f32 %v636, %v753
    %v755 = vpop.f32.mrf.mxu0
    %v756 = vpop.f32.mrf.mxu0
    %v757 = vadd.f32 %v636, %v756
    %v758 = vpop.f32.mrf.mxu0
    %759 = vmatprep.mubr.bf16.mxu0 0
    %760 = vmatmul.mubr.bf16.gmra.mxu0 %v679
    %v761 = vpop.f32.mrf.mxu0
    %v762 = vadd.f32 %v636, %v761
    %v763 = vpop.f32.mrf.mxu0
    %v764 = vpop.f32.mrf.mxu0
    %v765 = vadd.f32 %v636, %v764
    %v766 = vpop.f32.mrf.mxu0
    %767 = vmatprep.mubr.bf16.mxu0 0
    %768 = vmatmul.mubr.bf16.gmra.mxu0 %v682
    %v769 = vpop.f32.mrf.mxu0
    %v770 = vadd.f32 %v636, %v769
    %v771 = vpop.f32.mrf.mxu0
    %v772 = vpop.f32.mrf.mxu0
    %v773 = vadd.f32 %v636, %v772
    %v774 = vpop.f32.mrf.mxu0
    %775 = vmatprep.mubr.bf16.mxu0 0
    %776 = vmatmul.mubr.bf16.gmra.mxu0 %v685
    %v777 = vpop.f32.mrf.mxu0
    %v778 = vadd.f32 %v636, %v777
    %v779 = vpop.f32.mrf.mxu0
    %v780 = vpop.f32.mrf.mxu0
    %v781 = vadd.f32 %v636, %v780
    %v782 = vpop.f32.mrf.mxu0
    %783 = vdwg.mxu0
    %v784 = vlaneseq
    %v785 = vand.u32 %v784, 127
    %v786 = vld [vmem:[%s0] sm:$0xff]
    %v787 = vld [vmem:[%s0 + $0x8] sm:$0xff]
    %v788 = vld [vmem:[%s0 + $0x10] sm:$0xff]
    %v789 = vld [vmem:[%s0 + $0x18] sm:$0xff]
    %v790 = vld [vmem:[%s0 + $0x20] sm:$0xff]
    %v791 = vld [vmem:[%s0 + $0x28] sm:$0xff]
    %v792 = vld [vmem:[%s0 + $0x30] sm:$0xff]
    %v793 = vld [vmem:[%s0 + $0x38] sm:$0xff]
    %v794 = vld [vmem:[%s0 + $0x40] sm:$0xff]
    %v795 = vld [vmem:[%s0 + $0x48] sm:$0xff]
    %v796 = vld [vmem:[%s0 + $0x50] sm:$0xff]
    %v797 = vld [vmem:[%s0 + $0x58] sm:$0xff]
    %v798 = vld [vmem:[%s0 + $0x60] sm:$0xff]
    %v799 = vld [vmem:[%s0 + $0x68] sm:$0xff]
    %v800 = vld [vmem:[%s0 + $0x70] sm:$0xff]
    %v801 = vld [vmem:[%s0 + $0x78] sm:$0xff]
    %802 = vset.pattern.permute.xlu0 0
    %803 = vperm.xlu0 %802, %v786
    %v804 = vpop.permute.xlu0 %803
    %805 = vset.pattern.permute.xlu0 0
    %806 = vperm.xlu0 %805, %v787
    %v807 = vpop.permute.xlu0 %806
    %808 = vset.pattern.permute.xlu0 0
    %809 = vperm.xlu0 %808, %v788
    %v810 = vpop.permute.xlu0 %809
    %811 = vset.pattern.permute.xlu0 0
    %812 = vperm.xlu0 %811, %v789
    %v813 = vpop.permute.xlu0 %812
    %814 = vset.pattern.permute.xlu0 0
    %815 = vperm.xlu0 %814, %v790
    %v816 = vpop.permute.xlu0 %815
    %817 = vset.pattern.permute.xlu0 0
    %818 = vperm.xlu0 %817, %v791
    %v819 = vpop.permute.xlu0 %818
    %820 = vset.pattern.permute.xlu0 0
    %821 = vperm.xlu0 %820, %v792
    %v822 = vpop.permute.xlu0 %821
    %823 = vset.pattern.permute.xlu0 0
    %824 = vperm.xlu0 %823, %v793
    %v825 = vpop.permute.xlu0 %824
    %826 = vset.pattern.permute.xlu0 0
    %827 = vperm.xlu0 %826, %v794
    %v828 = vpop.permute.xlu0 %827
    %829 = vset.pattern.permute.xlu0 0
    %830 = vperm.xlu0 %829, %v795
    %v831 = vpop.permute.xlu0 %830
    %832 = vset.pattern.permute.xlu0 0
    %833 = vperm.xlu0 %832, %v796
    %v834 = vpop.permute.xlu0 %833
    %835 = vset.pattern.permute.xlu0 0
    %836 = vperm.xlu0 %835, %v797
    %v837 = vpop.permute.xlu0 %836
    %838 = vset.pattern.permute.xlu0 0
    %839 = vperm.xlu0 %838, %v798
    %v840 = vpop.permute.xlu0 %839
    %841 = vset.pattern.permute.xlu0 0
    %842 = vperm.xlu0 %841, %v799
    %v843 = vpop.permute.xlu0 %842
    %844 = vset.pattern.permute.xlu0 0
    %845 = vperm.xlu0 %844, %v800
    %v846 = vpop.permute.xlu0 %845
    %847 = vset.pattern.permute.xlu0 0
    %848 = vperm.xlu0 %847, %v801
    %v849 = vpop.permute.xlu0 %848
    %vm850 = vcmp.eq.s32.totalorder %v804, %v785
    %vm851 = vcmp.eq.s32.totalorder %v807, %v785
    %vm852 = vcmp.eq.s32.totalorder %v810, %v785
    %vm853 = vcmp.eq.s32.totalorder %v813, %v785
    %vm854 = vcmp.eq.s32.totalorder %v816, %v785
    %vm855 = vcmp.eq.s32.totalorder %v819, %v785
    %vm856 = vcmp.eq.s32.totalorder %v822, %v785
    %vm857 = vcmp.eq.s32.totalorder %v825, %v785
    %vm858 = vcmp.eq.s32.totalorder %v828, %v785
    %vm859 = vcmp.eq.s32.totalorder %v831, %v785
    %vm860 = vcmp.eq.s32.totalorder %v834, %v785
    %vm861 = vcmp.eq.s32.totalorder %v837, %v785
    %vm862 = vcmp.eq.s32.totalorder %v840, %v785
    %vm863 = vcmp.eq.s32.totalorder %v843, %v785
    %vm864 = vcmp.eq.s32.totalorder %v846, %v785
    %vm865 = vcmp.eq.s32.totalorder %v849, %v785
    %v866 = vsel %vm850, 1.0, 0.0
    %v867 = vsel %vm851, 1.0, 0.0
    %v868 = vsel %vm852, 1.0, 0.0
    %v869 = vsel %vm853, 1.0, 0.0
    %v870 = vsel %vm854, 1.0, 0.0
    %v871 = vsel %vm855, 1.0, 0.0
    %v872 = vsel %vm856, 1.0, 0.0
    %v873 = vsel %vm857, 1.0, 0.0
    %v874 = vsel %vm858, 1.0, 0.0
    %v875 = vsel %vm859, 1.0, 0.0
    %v876 = vsel %vm860, 1.0, 0.0
    %v877 = vsel %vm861, 1.0, 0.0
    %v878 = vsel %vm862, 1.0, 0.0
    %v879 = vsel %vm863, 1.0, 0.0
    %v880 = vsel %vm864, 1.0, 0.0
    %v881 = vsel %vm865, 1.0, 0.0
    %v882 = vpack.c.bf16 %v867, %v866
    %v883 = vpack.c.bf16 %v869, %v868
    %v884 = vpack.c.bf16 %v871, %v870
    %v885 = vpack.c.bf16 %v873, %v872
    %v886 = vpack.c.bf16 %v875, %v874
    %v887 = vpack.c.bf16 %v877, %v876
    %v888 = vpack.c.bf16 %v879, %v878
    %v889 = vpack.c.bf16 %v881, %v880
    %v890 = vld [vmem:[#allocation2] sm:$0xf]
    %v891 = vld [vmem:[#allocation2 + $0x4] sm:$0xf]
    %v894 = vunpack.c.l.b16 %v890
    %v895 = vunpack.c.l.b16 %v891
    %v896 = vpack.c.b16 %v895, %v894
    %vm898 = vcmask 130048
    %v900 = vsel %vm898, %v882, 0
    %v903 = vsel %vm898, %v883, 0
    %v906 = vsel %vm898, %v884, 0
    %v909 = vsel %vm898, %v885, 0
    %v912 = vsel %vm898, %v886, 0
    %v915 = vsel %vm898, %v887, 0
    %v918 = vsel %vm898, %v888, 0
    %v921 = vsel %vm898, %v889, 0
    %923 = vmatprep.subr.bf16.mxu0 0
    %924 = vmatpush1.bf16.msra.mxu0 0
    %925 = vmatprep.subr.bf16.mxu0 0
    %926 = vmatpush1.bf16.msra.mxu0 0
    %927 = vmatprep.subr.bf16.mxu0 0
    %928 = vmatpush1.bf16.msra.mxu0 0
    %929 = vmatprep.subr.bf16.mxu0 0
    %930 = vmatpush1.bf16.msra.mxu0 0
    %931 = vmatprep.subr.bf16.mxu0 0
    %932 = vmatpush1.bf16.msra.mxu0 0
    %933 = vmatprep.subr.bf16.mxu0 0
    %934 = vmatpush1.bf16.msra.mxu0 0
    %935 = vmatprep.subr.bf16.mxu0 0
    %936 = vmatpush1.bf16.msra.mxu0 0
    %937 = vmatprep.subr.bf16.mxu0 0
    %938 = vmatpush1.bf16.msra.mxu0 %v896
    %939 = vmatprep.subr.bf16.mxu0 0
    %940 = vmatpush2.bf16.msra.mxu0 0
    %941 = vmatprep.subr.bf16.mxu0 0
    %942 = vmatpush2.bf16.msra.mxu0 0
    %943 = vmatprep.subr.bf16.mxu0 0
    %944 = vmatpush2.bf16.msra.mxu0 0
    %945 = vmatprep.subr.bf16.mxu0 0
    %946 = vmatpush2.bf16.msra.mxu0 0
    %947 = vmatprep.subr.bf16.mxu0 0
    %948 = vmatpush2.bf16.msra.mxu0 0
    %949 = vmatprep.subr.bf16.mxu0 0
    %950 = vmatpush2.bf16.msra.mxu0 0
    %951 = vmatprep.subr.bf16.mxu0 0
    %952 = vmatpush2.bf16.msra.mxu0 0
    %953 = vmatprep.subr.bf16.mxu0 0
    %954 = vmatpush2.bf16.msra.mxu0 0
    %955 = vmatprep.mubr.bf16.mxu0 0
    %956 = vmatmul.mubr.bf16.gmra.mxu0 %v900
    %v957 = vpop.f32.mrf.mxu0
    %v958 = vadd.f32 0.0, %v957
    %v959 = vpop.f32.mrf.mxu0
    %v960 = vpop.f32.mrf.mxu0
    %v961 = vadd.f32 0.0, %v960
    %v962 = vpop.f32.mrf.mxu0
    %963 = vmatprep.mubr.bf16.mxu0 0
    %964 = vmatmul.mubr.bf16.gmra.mxu0 %v903
    %v965 = vpop.f32.mrf.mxu0
    %v966 = vadd.f32 0.0, %v965
    %v967 = vpop.f32.mrf.mxu0
    %v968 = vpop.f32.mrf.mxu0
    %v969 = vadd.f32 0.0, %v968
    %v970 = vpop.f32.mrf.mxu0
    %971 = vmatprep.mubr.bf16.mxu0 0
    %972 = vmatmul.mubr.bf16.gmra.mxu0 %v906
    %v973 = vpop.f32.mrf.mxu0
    %v974 = vadd.f32 0.0, %v973
    %v975 = vpop.f32.mrf.mxu0
    %v976 = vpop.f32.mrf.mxu0
    %v977 = vadd.f32 0.0, %v976
    %v978 = vpop.f32.mrf.mxu0
    %979 = vmatprep.mubr.bf16.mxu0 0
    %980 = vmatmul.mubr.bf16.gmra.mxu0 %v909
    %v981 = vpop.f32.mrf.mxu0
    %v982 = vadd.f32 0.0, %v981
    %v983 = vpop.f32.mrf.mxu0
    %v984 = vpop.f32.mrf.mxu0
    %v985 = vadd.f32 0.0, %v984
    %v986 = vpop.f32.mrf.mxu0
    %987 = vmatprep.mubr.bf16.mxu0 0
    %988 = vmatmul.mubr.bf16.gmra.mxu0 %v912
    %v989 = vpop.f32.mrf.mxu0
    %v990 = vadd.f32 0.0, %v989
    %v991 = vpop.f32.mrf.mxu0
    %v992 = vpop.f32.mrf.mxu0
    %v993 = vadd.f32 0.0, %v992
    %v994 = vpop.f32.mrf.mxu0
    %995 = vmatprep.mubr.bf16.mxu0 0
    %996 = vmatmul.mubr.bf16.gmra.mxu0 %v915
    %v997 = vpop.f32.mrf.mxu0
    %v998 = vadd.f32 0.0, %v997
    %v999 = vpop.f32.mrf.mxu0
    %v1000 = vpop.f32.mrf.mxu0
    %v1001 = vadd.f32 0.0, %v1000
    %v1002 = vpop.f32.mrf.mxu0
    %1003 = vmatprep.mubr.bf16.mxu0 0
    %1004 = vmatmul.mubr.bf16.gmra.mxu0 %v918
    %v1005 = vpop.f32.mrf.mxu0
    %v1006 = vadd.f32 0.0, %v1005
    %v1007 = vpop.f32.mrf.mxu0
    %v1008 = vpop.f32.mrf.mxu0
    %v1009 = vadd.f32 0.0, %v1008
    %v1010 = vpop.f32.mrf.mxu0
    %1011 = vmatprep.mubr.bf16.mxu0 0
    %1012 = vmatmul.mubr.bf16.gmra.mxu0 %v921
    %v1013 = vpop.f32.mrf.mxu0
    %v1014 = vadd.f32 0.0, %v1013
    %v1015 = vpop.f32.mrf.mxu0
    %v1016 = vpop.f32.mrf.mxu0
    %v1017 = vadd.f32 0.0, %v1016
    %v1018 = vpop.f32.mrf.mxu0
    %1019 = vdwg.mxu0
    %v1020 = vadd.f32 %v722, %v958
    %v1021 = vadd.f32 %v725, %v961
    %v1022 = vadd.f32 %v730, %v966
    %v1023 = vadd.f32 %v733, %v969
    %v1024 = vadd.f32 %v738, %v974
    %v1025 = vadd.f32 %v741, %v977
    %v1026 = vadd.f32 %v746, %v982
    %v1027 = vadd.f32 %v749, %v985
    %v1028 = vadd.f32 %v754, %v990
    %v1029 = vadd.f32 %v757, %v993
    %v1030 = vadd.f32 %v762, %v998
    %v1031 = vadd.f32 %v765, %v1001
    %v1032 = vadd.f32 %v770, %v1006
    %v1033 = vadd.f32 %v773, %v1009
    %v1034 = vadd.f32 %v778, %v1014
    %v1035 = vadd.f32 %v781, %v1017
    %v1036 = vld [vmem:[%s1] sm:$0xff]
    %v1037 = vld [vmem:[%s1 + $0x8] sm:$0xff]
    %v1038 = vld [vmem:[%s1 + $0x10] sm:$0xff]
    %v1039 = vld [vmem:[%s1 + $0x18] sm:$0xff]
    %v1040 = vld [vmem:[%s1 + $0x20] sm:$0xff]
    %v1041 = vld [vmem:[%s1 + $0x28] sm:$0xff]
    %v1042 = vld [vmem:[%s1 + $0x30] sm:$0xff]
    %v1043 = vld [vmem:[%s1 + $0x38] sm:$0xff]
    %v1044 = vld [vmem:[%s1 + $0x40] sm:$0xff]
    %v1045 = vld [vmem:[%s1 + $0x48] sm:$0xff]
    %v1046 = vld [vmem:[%s1 + $0x50] sm:$0xff]
    %v1047 = vld [vmem:[%s1 + $0x58] sm:$0xff]
    %v1048 = vld [vmem:[%s1 + $0x60] sm:$0xff]
    %v1049 = vld [vmem:[%s1 + $0x68] sm:$0xff]
    %v1050 = vld [vmem:[%s1 + $0x70] sm:$0xff]
    %v1051 = vld [vmem:[%s1 + $0x78] sm:$0xff]
    %1052 = vset.pattern.permute.xlu0 0
    %1053 = vperm.xlu0 %1052, %v1036
    %v1054 = vpop.permute.xlu0 %1053
    %1055 = vset.pattern.permute.xlu0 0
    %1056 = vperm.xlu0 %1055, %v1037
    %v1057 = vpop.permute.xlu0 %1056
    %1058 = vset.pattern.permute.xlu0 0
    %1059 = vperm.xlu0 %1058, %v1038
    %v1060 = vpop.permute.xlu0 %1059
    %1061 = vset.pattern.permute.xlu0 0
    %1062 = vperm.xlu0 %1061, %v1039
    %v1063 = vpop.permute.xlu0 %1062
    %1064 = vset.pattern.permute.xlu0 0
    %1065 = vperm.xlu0 %1064, %v1040
    %v1066 = vpop.permute.xlu0 %1065
    %1067 = vset.pattern.permute.xlu0 0
    %1068 = vperm.xlu0 %1067, %v1041
    %v1069 = vpop.permute.xlu0 %1068
    %1070 = vset.pattern.permute.xlu0 0
    %1071 = vperm.xlu0 %1070, %v1042
    %v1072 = vpop.permute.xlu0 %1071
    %1073 = vset.pattern.permute.xlu0 0
    %1074 = vperm.xlu0 %1073, %v1043
    %v1075 = vpop.permute.xlu0 %1074
    %1076 = vset.pattern.permute.xlu0 0
    %1077 = vperm.xlu0 %1076, %v1044
    %v1078 = vpop.permute.xlu0 %1077
    %1079 = vset.pattern.permute.xlu0 0
    %1080 = vperm.xlu0 %1079, %v1045
    %v1081 = vpop.permute.xlu0 %1080
    %1082 = vset.pattern.permute.xlu0 0
    %1083 = vperm.xlu0 %1082, %v1046
    %v1084 = vpop.permute.xlu0 %1083
    %1085 = vset.pattern.permute.xlu0 0
    %1086 = vperm.xlu0 %1085, %v1047
    %v1087 = vpop.permute.xlu0 %1086
    %1088 = vset.pattern.permute.xlu0 0
    %1089 = vperm.xlu0 %1088, %v1048
    %v1090 = vpop.permute.xlu0 %1089
    %1091 = vset.pattern.permute.xlu0 0
    %1092 = vperm.xlu0 %1091, %v1049
    %v1093 = vpop.permute.xlu0 %1092
    %1094 = vset.pattern.permute.xlu0 0
    %1095 = vperm.xlu0 %1094, %v1050
    %v1096 = vpop.permute.xlu0 %1095
    %1097 = vset.pattern.permute.xlu0 0
    %1098 = vperm.xlu0 %1097, %v1051
    %v1099 = vpop.permute.xlu0 %1098
    %vm1100 = vcmp.eq.s32.totalorder %v1054, %v785
    %vm1101 = vcmp.eq.s32.totalorder %v1057, %v785
    %vm1102 = vcmp.eq.s32.totalorder %v1060, %v785
    %vm1103 = vcmp.eq.s32.totalorder %v1063, %v785
    %vm1104 = vcmp.eq.s32.totalorder %v1066, %v785
    %vm1105 = vcmp.eq.s32.totalorder %v1069, %v785
    %vm1106 = vcmp.eq.s32.totalorder %v1072, %v785
    %vm1107 = vcmp.eq.s32.totalorder %v1075, %v785
    %vm1108 = vcmp.eq.s32.totalorder %v1078, %v785
    %vm1109 = vcmp.eq.s32.totalorder %v1081, %v785
    %vm1110 = vcmp.eq.s32.totalorder %v1084, %v785
    %vm1111 = vcmp.eq.s32.totalorder %v1087, %v785
    %vm1112 = vcmp.eq.s32.totalorder %v1090, %v785
    %vm1113 = vcmp.eq.s32.totalorder %v1093, %v785
    %vm1114 = vcmp.eq.s32.totalorder %v1096, %v785
    %vm1115 = vcmp.eq.s32.totalorder %v1099, %v785
    %v1116 = vsel %vm1100, 1.0, 0.0
    %v1117 = vsel %vm1101, 1.0, 0.0
    %v1118 = vsel %vm1102, 1.0, 0.0
    %v1119 = vsel %vm1103, 1.0, 0.0
    %v1120 = vsel %vm1104, 1.0, 0.0
    %v1121 = vsel %vm1105, 1.0, 0.0
    %v1122 = vsel %vm1106, 1.0, 0.0
    %v1123 = vsel %vm1107, 1.0, 0.0
    %v1124 = vsel %vm1108, 1.0, 0.0
    %v1125 = vsel %vm1109, 1.0, 0.0
    %v1126 = vsel %vm1110, 1.0, 0.0
    %v1127 = vsel %vm1111, 1.0, 0.0
    %v1128 = vsel %vm1112, 1.0, 0.0
    %v1129 = vsel %vm1113, 1.0, 0.0
    %v1130 = vsel %vm1114, 1.0, 0.0
    %v1131 = vsel %vm1115, 1.0, 0.0
    %v1132 = vpack.c.bf16 %v1117, %v1116
    %v1133 = vpack.c.bf16 %v1119, %v1118
    %v1134 = vpack.c.bf16 %v1121, %v1120
    %v1135 = vpack.c.bf16 %v1123, %v1122
    %v1136 = vpack.c.bf16 %v1125, %v1124
    %v1137 = vpack.c.bf16 %v1127, %v1126
    %v1138 = vpack.c.bf16 %v1129, %v1128
    %v1139 = vpack.c.bf16 %v1131, %v1130
    %v1140 = vld [vmem:[#allocation3] sm:$0xf]
    %v1141 = vld [vmem:[#allocation3 + $0x4] sm:$0xf]
    %v1144 = vunpack.c.l.b16 %v1140
    %v1145 = vunpack.c.l.b16 %v1141
    %v1146 = vpack.c.b16 %v1145, %v1144
    %v1149 = vsel %vm898, %v1132, 0
    %v1152 = vsel %vm898, %v1133, 0
    %v1155 = vsel %vm898, %v1134, 0
    %v1158 = vsel %vm898, %v1135, 0
    %v1161 = vsel %vm898, %v1136, 0
    %v1164 = vsel %vm898, %v1137, 0
    %v1167 = vsel %vm898, %v1138, 0
    %v1170 = vsel %vm898, %v1139, 0
    %1172 = vmatprep.subr.bf16.mxu0 0
    %1173 = vmatpush1.bf16.msra.mxu0 0
    %1174 = vmatprep.subr.bf16.mxu0 0
    %1175 = vmatpush1.bf16.msra.mxu0 0
    %1176 = vmatprep.subr.bf16.mxu0 0
    %1177 = vmatpush1.bf16.msra.mxu0 0
    %1178 = vmatprep.subr.bf16.mxu0 0
    %1179 = vmatpush1.bf16.msra.mxu0 0
    %1180 = vmatprep.subr.bf16.mxu0 0
    %1181 = vmatpush1.bf16.msra.mxu0 0
    %1182 = vmatprep.subr.bf16.mxu0 0
    %1183 = vmatpush1.bf16.msra.mxu0 0
    %1184 = vmatprep.subr.bf16.mxu0 0
    %1185 = vmatpush1.bf16.msra.mxu0 0
    %1186 = vmatprep.subr.bf16.mxu0 0
    %1187 = vmatpush1.bf16.msra.mxu0 %v1146
    %1188 = vmatprep.subr.bf16.mxu0 0
    %1189 = vmatpush2.bf16.msra.mxu0 0
    %1190 = vmatprep.subr.bf16.mxu0 0
    %1191 = vmatpush2.bf16.msra.mxu0 0
    %1192 = vmatprep.subr.bf16.mxu0 0
    %1193 = vmatpush2.bf16.msra.mxu0 0
    %1194 = vmatprep.subr.bf16.mxu0 0
    %1195 = vmatpush2.bf16.msra.mxu0 0
    %1196 = vmatprep.subr.bf16.mxu0 0
    %1197 = vmatpush2.bf16.msra.mxu0 0
    %1198 = vmatprep.subr.bf16.mxu0 0
    %1199 = vmatpush2.bf16.msra.mxu0 0
    %1200 = vmatprep.subr.bf16.mxu0 0
    %1201 = vmatpush2.bf16.msra.mxu0 0
    %1202 = vmatprep.subr.bf16.mxu0 0
    %1203 = vmatpush2.bf16.msra.mxu0 0
    %1204 = vmatprep.mubr.bf16.mxu0 0
    %1205 = vmatmul.mubr.bf16.gmra.mxu0 %v1149
    %v1206 = vpop.f32.mrf.mxu0
    %v1207 = vadd.f32 0.0, %v1206
    %v1208 = vpop.f32.mrf.mxu0
    %v1209 = vpop.f32.mrf.mxu0
    %v1210 = vadd.f32 0.0, %v1209
    %v1211 = vpop.f32.mrf.mxu0
    %1212 = vmatprep.mubr.bf16.mxu0 0
    %1213 = vmatmul.mubr.bf16.gmra.mxu0 %v1152
    %v1214 = vpop.f32.mrf.mxu0
    %v1215 = vadd.f32 0.0, %v1214
    %v1216 = vpop.f32.mrf.mxu0
    %v1217 = vpop.f32.mrf.mxu0
    %v1218 = vadd.f32 0.0, %v1217
    %v1219 = vpop.f32.mrf.mxu0
    %1220 = vmatprep.mubr.bf16.mxu0 0
    %1221 = vmatmul.mubr.bf16.gmra.mxu0 %v1155
    %v1222 = vpop.f32.mrf.mxu0
    %v1223 = vadd.f32 0.0, %v1222
    %v1224 = vpop.f32.mrf.mxu0
    %v1225 = vpop.f32.mrf.mxu0
    %v1226 = vadd.f32 0.0, %v1225
    %v1227 = vpop.f32.mrf.mxu0
    %1228 = vmatprep.mubr.bf16.mxu0 0
    %1229 = vmatmul.mubr.bf16.gmra.mxu0 %v1158
    %v1230 = vpop.f32.mrf.mxu0
    %v1231 = vadd.f32 0.0, %v1230
    %v1232 = vpop.f32.mrf.mxu0
    %v1233 = vpop.f32.mrf.mxu0
    %v1234 = vadd.f32 0.0, %v1233
    %v1235 = vpop.f32.mrf.mxu0
    %1236 = vmatprep.mubr.bf16.mxu0 0
    %1237 = vmatmul.mubr.bf16.gmra.mxu0 %v1161
    %v1238 = vpop.f32.mrf.mxu0
    %v1239 = vadd.f32 0.0, %v1238
    %v1240 = vpop.f32.mrf.mxu0
    %v1241 = vpop.f32.mrf.mxu0
    %v1242 = vadd.f32 0.0, %v1241
    %v1243 = vpop.f32.mrf.mxu0
    %1244 = vmatprep.mubr.bf16.mxu0 0
    %1245 = vmatmul.mubr.bf16.gmra.mxu0 %v1164
    %v1246 = vpop.f32.mrf.mxu0
    %v1247 = vadd.f32 0.0, %v1246
    %v1248 = vpop.f32.mrf.mxu0
    %v1249 = vpop.f32.mrf.mxu0
    %v1250 = vadd.f32 0.0, %v1249
    %v1251 = vpop.f32.mrf.mxu0
    %1252 = vmatprep.mubr.bf16.mxu0 0
    %1253 = vmatmul.mubr.bf16.gmra.mxu0 %v1167
    %v1254 = vpop.f32.mrf.mxu0
    %v1255 = vadd.f32 0.0, %v1254
    %v1256 = vpop.f32.mrf.mxu0
    %v1257 = vpop.f32.mrf.mxu0
    %v1258 = vadd.f32 0.0, %v1257
    %v1259 = vpop.f32.mrf.mxu0
    %1260 = vmatprep.mubr.bf16.mxu0 0
    %1261 = vmatmul.mubr.bf16.gmra.mxu0 %v1170
    %v1262 = vpop.f32.mrf.mxu0
    %v1263 = vadd.f32 0.0, %v1262
    %v1264 = vpop.f32.mrf.mxu0
    %v1265 = vpop.f32.mrf.mxu0
    %v1266 = vadd.f32 0.0, %v1265
    %v1267 = vpop.f32.mrf.mxu0
    %1268 = vdwg.mxu0
    %v1269 = vadd.f32 %v1020, %v1207
    %v1270 = vadd.f32 %v1021, %v1210
    %v1271 = vadd.f32 %v1022, %v1215
    %v1272 = vadd.f32 %v1023, %v1218
    %v1273 = vadd.f32 %v1024, %v1223
    %v1274 = vadd.f32 %v1025, %v1226
    %v1275 = vadd.f32 %v1026, %v1231
    %v1276 = vadd.f32 %v1027, %v1234
    %v1277 = vadd.f32 %v1028, %v1239
    %v1278 = vadd.f32 %v1029, %v1242
    %v1279 = vadd.f32 %v1030, %v1247
    %v1280 = vadd.f32 %v1031, %v1250
    %v1281 = vadd.f32 %v1032, %v1255
    %v1282 = vadd.f32 %v1033, %v1258
    %v1283 = vadd.f32 %v1034, %v1263
    %v1284 = vadd.f32 %v1035, %v1266
    %v1285 = vld [vmem:[%s12] sm:$0x1]
    %v1287 = vlaneseq
    %v1288 = vshrl.u32 %v1287, 7
    %v1289 = vsub.s32 0, %v1288
    %v1290 = vrot.slane %v1285, %v1289
    %v1292 = vadd.f32 %v1269, %v1290
    %v1293 = vadd.f32 %v1270, %v1290
    %v1294 = vadd.f32 %v1271, %v1290
    %v1295 = vadd.f32 %v1272, %v1290
    %v1296 = vadd.f32 %v1273, %v1290
    %v1297 = vadd.f32 %v1274, %v1290
    %v1298 = vadd.f32 %v1275, %v1290
    %v1299 = vadd.f32 %v1276, %v1290
    %v1300 = vadd.f32 %v1277, %v1290
    %v1301 = vadd.f32 %v1278, %v1290
    %v1302 = vadd.f32 %v1279, %v1290
    %v1303 = vadd.f32 %v1280, %v1290
    %v1304 = vadd.f32 %v1281, %v1290
    %v1305 = vadd.f32 %v1282, %v1290
    %v1306 = vadd.f32 %v1283, %v1290
    %v1307 = vadd.f32 %v1284, %v1290
    %v1308 = vmax.f32 %v1292, 0.0
    %v1309 = vmax.f32 %v1293, 0.0
    %v1310 = vmax.f32 %v1294, 0.0
    %v1311 = vmax.f32 %v1295, 0.0
    %v1312 = vmax.f32 %v1296, 0.0
    %v1313 = vmax.f32 %v1297, 0.0
    %v1314 = vmax.f32 %v1298, 0.0
    %v1315 = vmax.f32 %v1299, 0.0
    %v1316 = vmax.f32 %v1300, 0.0
    %v1317 = vmax.f32 %v1301, 0.0
    %v1318 = vmax.f32 %v1302, 0.0
    %v1319 = vmax.f32 %v1303, 0.0
    %v1320 = vmax.f32 %v1304, 0.0
    %v1321 = vmax.f32 %v1305, 0.0
    %v1322 = vmax.f32 %v1306, 0.0
    %v1323 = vmax.f32 %v1307, 0.0
    %v1324 = vpack.c.bf16 %v1309, %v1308
    %v1325 = vpack.c.bf16 %v1311, %v1310
    %v1326 = vpack.c.bf16 %v1313, %v1312
    %v1327 = vpack.c.bf16 %v1315, %v1314
    %v1328 = vpack.c.bf16 %v1317, %v1316
    %v1329 = vpack.c.bf16 %v1319, %v1318
    %v1330 = vpack.c.bf16 %v1321, %v1320
    %v1331 = vpack.c.bf16 %v1323, %v1322
    %v1332 = vld [vmem:[#allocation15] sm:$0xf]
    %v1333 = vld [vmem:[#allocation15 + $0x4] sm:$0xf]
    %v1334 = vld [vmem:[#allocation15 + $0x8] sm:$0xf]
    %v1335 = vld [vmem:[#allocation15 + $0xc] sm:$0xf]
    %v1336 = vld [vmem:[#allocation15 + $0x10] sm:$0xf]
    %v1337 = vld [vmem:[#allocation15 + $0x14] sm:$0xf]
    %v1338 = vld [vmem:[#allocation15 + $0x18] sm:$0xf]
    %v1339 = vld [vmem:[#allocation15 + $0x1c] sm:$0xf]
    %v1340 = vld [vmem:[#allocation15 + $0x20] sm:$0xf]
    %v1341 = vld [vmem:[#allocation15 + $0x24] sm:$0xf]
    %v1342 = vld [vmem:[#allocation15 + $0x28] sm:$0xf]
    %v1343 = vld [vmem:[#allocation15 + $0x2c] sm:$0xf]
    %v1344 = vld [vmem:[#allocation15 + $0x30] sm:$0xf]
    %v1345 = vld [vmem:[#allocation15 + $0x34] sm:$0xf]
    %v1346 = vld [vmem:[#allocation15 + $0x38] sm:$0xf]
    %v1347 = vld [vmem:[#allocation15 + $0x3c] sm:$0xf]
    %v1348 = vld [vmem:[%s14] sm:$0x1]
    %v1350 = vlaneseq
    %v1351 = vshrl.u32 %v1350, 7
    %v1352 = vsub.s32 0, %v1351
    %v1353 = vrot.slane %v1348, %v1352
    %v1371 = vunpack.c.l.b16 %v1332
    %v1372 = vunpack.c.l.b16 %v1333
    %v1373 = vunpack.c.l.b16 %v1334
    %v1374 = vunpack.c.l.b16 %v1335
    %v1375 = vunpack.c.l.b16 %v1336
    %v1376 = vunpack.c.l.b16 %v1337
    %v1377 = vunpack.c.l.b16 %v1338
    %v1378 = vunpack.c.l.b16 %v1339
    %v1379 = vunpack.c.l.b16 %v1340
    %v1380 = vunpack.c.l.b16 %v1341
    %v1381 = vunpack.c.l.b16 %v1342
    %v1382 = vunpack.c.l.b16 %v1343
    %v1383 = vunpack.c.l.b16 %v1344
    %v1384 = vunpack.c.l.b16 %v1345
    %v1385 = vunpack.c.l.b16 %v1346
    %v1386 = vunpack.c.l.b16 %v1347
    %v1387 = vpack.c.b16 %v1372, %v1371
    %v1388 = vpack.c.b16 %v1374, %v1373
    %v1389 = vpack.c.b16 %v1376, %v1375
    %v1390 = vpack.c.b16 %v1378, %v1377
    %v1391 = vpack.c.b16 %v1380, %v1379
    %v1392 = vpack.c.b16 %v1382, %v1381
    %v1393 = vpack.c.b16 %v1384, %v1383
    %v1394 = vpack.c.b16 %v1386, %v1385
    %1403 = vmatprep.subr.bf16.mxu0 0
    %1404 = vmatpush1.bf16.msra.mxu0 %v1394
    %1405 = vmatprep.subr.bf16.mxu0 0
    %1406 = vmatpush1.bf16.msra.mxu0 %v1393
    %1407 = vmatprep.subr.bf16.mxu0 0
    %1408 = vmatpush1.bf16.msra.mxu0 %v1392
    %1409 = vmatprep.subr.bf16.mxu0 0
    %1410 = vmatpush1.bf16.msra.mxu0 %v1391
    %1411 = vmatprep.subr.bf16.mxu0 0
    %1412 = vmatpush1.bf16.msra.mxu0 %v1390
    %1413 = vmatprep.subr.bf16.mxu0 0
    %1414 = vmatpush1.bf16.msra.mxu0 %v1389
    %1415 = vmatprep.subr.bf16.mxu0 0
    %1416 = vmatpush1.bf16.msra.mxu0 %v1388
    %1417 = vmatprep.subr.bf16.mxu0 0
    %1418 = vmatpush1.bf16.msra.mxu0 %v1387
    %1419 = vmatprep.subr.bf16.mxu0 0
    %1420 = vmatpush2.bf16.msra.mxu0 0
    %1421 = vmatprep.subr.bf16.mxu0 0
    %1422 = vmatpush2.bf16.msra.mxu0 0
    %1423 = vmatprep.subr.bf16.mxu0 0
    %1424 = vmatpush2.bf16.msra.mxu0 0
    %1425 = vmatprep.subr.bf16.mxu0 0
    %1426 = vmatpush2.bf16.msra.mxu0 0
    %1427 = vmatprep.subr.bf16.mxu0 0
    %1428 = vmatpush2.bf16.msra.mxu0 0
    %1429 = vmatprep.subr.bf16.mxu0 0
    %1430 = vmatpush2.bf16.msra.mxu0 0
    %1431 = vmatprep.subr.bf16.mxu0 0
    %1432 = vmatpush2.bf16.msra.mxu0 0
    %1433 = vmatprep.subr.bf16.mxu0 0
    %1434 = vmatpush2.bf16.msra.mxu0 0
    %1435 = vmatprep.mubr.bf16.mxu0 0
    %1436 = vmatmul.mubr.bf16.gmra.mxu0 %v1324
    %v1437 = vpop.f32.mrf.mxu0
    %v1438 = vadd.f32 %v1353, %v1437
    %v1439 = vpop.f32.mrf.mxu0
    %v1440 = vpop.f32.mrf.mxu0
    %v1441 = vadd.f32 %v1353, %v1440
    %v1442 = vpop.f32.mrf.mxu0
    %1443 = vmatprep.mubr.bf16.mxu0 0
    %1444 = vmatmul.mubr.bf16.gmra.mxu0 %v1325
    %v1445 = vpop.f32.mrf.mxu0
    %v1446 = vadd.f32 %v1353, %v1445
    %v1447 = vpop.f32.mrf.mxu0
    %v1448 = vpop.f32.mrf.mxu0
    %v1449 = vadd.f32 %v1353, %v1448
    %v1450 = vpop.f32.mrf.mxu0
    %1451 = vmatprep.mubr.bf16.mxu0 0
    %1452 = vmatmul.mubr.bf16.gmra.mxu0 %v1326
    %v1453 = vpop.f32.mrf.mxu0
    %v1454 = vadd.f32 %v1353, %v1453
    %v1455 = vpop.f32.mrf.mxu0
    %v1456 = vpop.f32.mrf.mxu0
    %v1457 = vadd.f32 %v1353, %v1456
    %v1458 = vpop.f32.mrf.mxu0
    %1459 = vmatprep.mubr.bf16.mxu0 0
    %1460 = vmatmul.mubr.bf16.gmra.mxu0 %v1327
    %v1461 = vpop.f32.mrf.mxu0
    %v1462 = vadd.f32 %v1353, %v1461
    %v1463 = vpop.f32.mrf.mxu0
    %v1464 = vpop.f32.mrf.mxu0
    %v1465 = vadd.f32 %v1353, %v1464
    %v1466 = vpop.f32.mrf.mxu0
    %1467 = vmatprep.mubr.bf16.mxu0 0
    %1468 = vmatmul.mubr.bf16.gmra.mxu0 %v1328
    %v1469 = vpop.f32.mrf.mxu0
    %v1470 = vadd.f32 %v1353, %v1469
    %v1471 = vpop.f32.mrf.mxu0
    %v1472 = vpop.f32.mrf.mxu0
    %v1473 = vadd.f32 %v1353, %v1472
    %v1474 = vpop.f32.mrf.mxu0
    %1475 = vmatprep.mubr.bf16.mxu0 0
    %1476 = vmatmul.mubr.bf16.gmra.mxu0 %v1329
    %v1477 = vpop.f32.mrf.mxu0
    %v1478 = vadd.f32 %v1353, %v1477
    %v1479 = vpop.f32.mrf.mxu0
    %v1480 = vpop.f32.mrf.mxu0
    %v1481 = vadd.f32 %v1353, %v1480
    %v1482 = vpop.f32.mrf.mxu0
    %1483 = vmatprep.mubr.bf16.mxu0 0
    %1484 = vmatmul.mubr.bf16.gmra.mxu0 %v1330
    %v1485 = vpop.f32.mrf.mxu0
    %v1486 = vadd.f32 %v1353, %v1485
    %v1487 = vpop.f32.mrf.mxu0
    %v1488 = vpop.f32.mrf.mxu0
    %v1489 = vadd.f32 %v1353, %v1488
    %v1490 = vpop.f32.mrf.mxu0
    %1491 = vmatprep.mubr.bf16.mxu0 0
    %1492 = vmatmul.mubr.bf16.gmra.mxu0 %v1331
    %v1493 = vpop.f32.mrf.mxu0
    %v1494 = vadd.f32 %v1353, %v1493
    %v1495 = vpop.f32.mrf.mxu0
    %v1496 = vpop.f32.mrf.mxu0
    %v1497 = vadd.f32 %v1353, %v1496
    %v1498 = vpop.f32.mrf.mxu0
    %1499 = vdwg.mxu0
    %1500 = vst [vmem:[#allocation17] sm:$0xff] %v1438
    %1501 = vst [vmem:[#allocation17 + $0x8] sm:$0xff] %v1441
    %1502 = vst [vmem:[#allocation17 + $0x10] sm:$0xff] %v1446
    %1503 = vst [vmem:[#allocation17 + $0x18] sm:$0xff] %v1449
    %1504 = vst [vmem:[#allocation17 + $0x20] sm:$0xff] %v1454
    %1505 = vst [vmem:[#allocation17 + $0x28] sm:$0xff] %v1457
    %1506 = vst [vmem:[#allocation17 + $0x30] sm:$0xff] %v1462
    %1507 = vst [vmem:[#allocation17 + $0x38] sm:$0xff] %v1465
    %1508 = vst [vmem:[#allocation17 + $0x40] sm:$0xff] %v1470
    %1509 = vst [vmem:[#allocation17 + $0x48] sm:$0xff] %v1473
    %1510 = vst [vmem:[#allocation17 + $0x50] sm:$0xff] %v1478
    %1511 = vst [vmem:[#allocation17 + $0x58] sm:$0xff] %v1481
    %1512 = vst [vmem:[#allocation17 + $0x60] sm:$0xff] %v1486
    %1513 = vst [vmem:[#allocation17 + $0x68] sm:$0xff] %v1489
    %1514 = vst [vmem:[#allocation17 + $0x70] sm:$0xff] %v1494
    %1515 = vst [vmem:[#allocation17 + $0x78] sm:$0xff] %v1497
    // Predicated region
    $region94: #{tpu_custom_call.1} parent=1 // pred_check
      _
    $region95: #{tpu_custom_call.1} parent=1 // pred_check_branch
      %1517 = sbr.rel (0) target = $region97
    $region96: #{tpu_custom_call.1} parent=1 // pred_region
      %s1519 = ssub.s32 256, 256
      %1520 = vsyncadd [#allocation6], %s1519
      %s1521 = sshll.u32 [#allocation16], 4
      %s1522 = int_to_ptr.vmem [resolvable:$true] %s1521
      %1527 = dma.vmem_to_hbm [thread:$0]  %s1522, 256, %s15, [#allocation6], 128, 128, 8
    $region97: #{tpu_custom_call.1} parent=1 // pred_fallthru
      _
    // Predicated region
    $region98: #{tpu_custom_call.1} parent=1 // pred_check
      _
    $region99: #{tpu_custom_call.1} parent=1 // pred_check_branch
      %1529 = sbr.rel (0) target = $region101
    $region100: #{tpu_custom_call.1} parent=1 // pred_region
      %s1531 = ssub.s32 2048, 2048
      %1532 = vsyncadd [#allocation18], %s1531
      %s1533 = sshll.u32 [#allocation17], 4
      %s1534 = int_to_ptr.vmem [resolvable:$true] %s1533
      %1539 = dma.vmem_to_hbm [thread:$0]  %s1534, 2048, %s16, [#allocation18], 128, 128, 8
    $region101: #{tpu_custom_call.1} parent=1 // pred_fallthru
      _
    // Predicated region
    $region102: #{tpu_custom_call.1} parent=1 // pred_check
      _
    $region103: #{tpu_custom_call.1} parent=1 // pred_check_branch
      %1541 = sbr.rel (0) target = $region105
    $region104: #{tpu_custom_call.1} parent=1 // pred_region
      %1542 = dma.done [#allocation6], 256
    $region105: #{tpu_custom_call.1} parent=1 // pred_fallthru
      _
    // Predicated region
    $region106: #{tpu_custom_call.1} parent=1 // pred_check
      _
    $region107: #{tpu_custom_call.1} parent=1 // pred_check_branch
      %1544 = sbr.rel (0) target = $region109
    $region108: #{tpu_custom_call.1} parent=1 // pred_region
      %1545 = dma.done [#allocation18], 2048
    $region109: #{tpu_custom_call.1} parent=1 // pred_fallthru
      _
    %1546 = vsyncpa [#allocation5], 1
    %1547 = vsyncpa [#allocation8], 1
    %1548 = vsyncpa [#allocation11], 1
    %1549 = vsyncpa [#allocation14], 1
    %1550 = vsyncpa [#allocation6], 1
    %1551 = vsyncpa [#allocation18], 1

</llo_original>
